<compile_context>
chip_gen: v5e
topology: v5e:2x2
jax: 0.10.0
libtpu: 0.0.40
codegen_flags: <defaults>
</compile_context>

<pallas_src>
import math
import functools

import jax
import jax.numpy as jnp
from jax.experimental import pallas as pl
from jax.experimental.pallas import tpu as pltpu

_LOG_2PI = math.log(2.0 * math.pi)


# --------------------------------------------------------------------------
# Fused flow kernel: all K FlowSteps + final Gaussian prior.
# Layout: channels on sublanes, flattened (batch, H, W) on 128 lanes.
# --------------------------------------------------------------------------

def _fused_flow_kernel(mask_ref, z_in_ref, an_bias_ref, an_scale_ref,
                       w1x1_ref, w1_ref, b1_ref, w2_ref, b2_ref, w3_ref, b3_ref,
                       z_out_ref, ld_out_ref, lp_out_ref,
                       z_scr, ld_scr, *, Ws, Ch):
    k = pl.program_id(0)
    rows = z_scr.shape[-1]                       # B*Hs*Ws (lane axis)

    @pl.when(k == 0)
    def _init():
        z_scr[...] = z_in_ref[...]               # bring z into residence
        ld_scr[...] = jnp.zeros_like(ld_scr)

    # ---- FlowStep: ActNorm (per-channel affine) then Invert1x1Conv ----------
    z = (z_scr[...] + an_bias_ref[...]) * an_scale_ref[...]          # (C, rows)
    # 1x1 channel mixing kept in f32 (tiny matmul, protects NLL precision).
    z = jnp.dot(w1x1_ref[...], z, preferred_element_type=jnp.float32)

    z1 = z[:Ch, :]                                                   # (Ch, rows)
    z2 = z[Ch:, :]

    def conv3x3(x, w_ref):
        # Zero-padded 3x3 conv: 9 lane-rolled taps (XLU) masked at the image
        # border, stacked along sublanes -> one im2col matmul on the MXU.
        taps = []
        for t in range(9):
            ri, rj = t // 3 - 1, t % 3 - 1
            off = ri * Ws + rj
            if off == 0:
                taps.append(x)                                       # center tap
            else:
                rolled = pltpu.roll(x, shift=(-off) % rows, axis=1)
                taps.append(rolled * mask_ref[t:t + 1, :])
        im2col = jnp.concatenate(taps, axis=0)                       # (9*Cin, rows)
        return jnp.dot(w_ref[...], im2col.astype(jnp.bfloat16),
                       preferred_element_type=jnp.float32)           # (Cout, rows)

    # ---- ConditionalCoupling NN (h=None): 3x3 -> ReLU -> 1x1 -> ReLU -> 3x3 -
    h = conv3x3(z1, w1_ref) + b1_ref[...]
    h = jnp.maximum(h, 0.0)
    h = jnp.dot(w2_ref[...], h.astype(jnp.bfloat16),
                preferred_element_type=jnp.float32) + b2_ref[...]
    h = jnp.maximum(h, 0.0)
    h = conv3x3(h, w3_ref) + b3_ref[...]                             # (C, rows)

    shift = h[:Ch, :]
    logs = h[Ch:, :]

    # scale = sigmoid(logs + 2); log(scale) = -softplus(-(logs + 2)) (stable).
    # Reuse the softplus exponentials for the sigmoid (saves one EUP exp).
    t_ = logs + 2.0
    m = jnp.maximum(-t_, 0.0)
    e1 = jnp.exp(-t_ - m)
    e0 = jnp.exp(-m)
    denom = e0 + e1
    logscale = -(m + jnp.log(denom))
    scale = e0 * pl.reciprocal(denom, approx=True)

    z2n = (z2 + shift) * scale

    # Accumulate raw logscale; reduce only at finalize (keeps XLU off hot path).
    ld_scr[...] = ld_scr[...] + logscale

    # Store halves directly (vreg-aligned sublane offsets, no lane shuffle).
    z_scr[:Ch, :] = z1
    z_scr[Ch:, :] = z2n

    @pl.when(k == pl.num_programs(0) - 1)
    def _finalize():
        z_fin = z_scr[...]
        z_out_ref[...] = z_fin
        # coupling logdet per flattened position (sum over channels & steps)
        ld_out_ref[...] = jnp.sum(ld_scr[...], axis=0, keepdims=True)
        # GaussianPrior(final=True): -0.5*z^2 summed over channels; the
        # -0.5*log(2*pi) constant is hoisted outside the kernel.
        lp_out_ref[...] = jnp.sum(-0.5 * z_fin * z_fin, axis=0, keepdims=True)


# --------------------------------------------------------------------------
# Glue (plain JAX): squeeze, parameter construction / packing
# --------------------------------------------------------------------------

def squeeze2(x):
    """SqueezeTS(factor=2): NCHW (B,C,H,W) -> (B,4C,H/2,W/2)."""
    B, C, H, W = x.shape
    x = x.reshape(B, C, H // 2, 2, W // 2, 2)
    x = jnp.transpose(x, (0, 1, 3, 5, 2, 4))
    return x.reshape(B, 4 * C, H // 2, W // 2)


def init_params(key, C, filter_size, K):
    """Deterministic synthetic parameters for K flow steps on C channels.
    Conv weights use PyTorch (out_ch, in_ch, kH, kW) layout."""
    Ch = C // 2
    F = filter_size
    steps = []
    for kkey in jax.random.split(key, K):
        ks = jax.random.split(kkey, 6)
        an_logs = 0.05 * jax.random.normal(ks[0], (C,), jnp.float32)
        an_bias = 0.05 * jax.random.normal(ks[1], (C,), jnp.float32)
        w_1x1, _ = jnp.linalg.qr(jax.random.normal(ks[2], (C, C), jnp.float32))
        w1 = 0.05 * jax.random.normal(ks[3], (F, Ch, 3, 3), jnp.float32)
        w2 = 0.05 * jax.random.normal(ks[4], (F, F), jnp.float32)
        w3 = 0.01 * jax.random.normal(ks[5], (C, F, 3, 3), jnp.float32)
        steps.append(dict(
            an_logs=an_logs, an_bias=an_bias, w_1x1=w_1x1,
            w1=w1, b1=jnp.zeros((F,), jnp.float32),
            w2=w2, b2=jnp.zeros((F,), jnp.float32),
            w3=w3, b3=jnp.zeros((C,), jnp.float32),
        ))
    return dict(steps=steps)


def prepare_flow_params(params, Hs, Ws):
    """One-time packing: stack per-step weights along K, flatten conv weights
    to im2col layout, cast NN matmul weights to bf16, precompute exp(an_logs)
    and the parameter-only logdet terms (ActNorm + 1x1-conv slogdet)."""
    steps = params["steps"]

    def stack(name):
        return jnp.stack([s[name] for s in steps], axis=0)

    an_logs = stack("an_logs")                       # (K, C)
    w_1x1 = stack("w_1x1")                           # (K, C, C)   forward weight
    w1 = stack("w1")                                 # (K, F, Ch, 3, 3)
    w2 = stack("w2")                                 # (K, F, F)
    w3 = stack("w3")                                 # (K, C, F, 3, 3)

    def flat_conv(w):                                # (K,Co,Ci,3,3) -> (K,Co,9*Ci)
        K_, Co, Ci = w.shape[0], w.shape[1], w.shape[2]
        return jnp.transpose(w, (0, 1, 3, 4, 2)).reshape(K_, Co, 9 * Ci)

    packed = dict(
        an_bias=stack("an_bias")[..., None],                      # (K,C,1) f32
        an_scale=jnp.exp(an_logs)[..., None],                     # (K,C,1) f32
        w_1x1=w_1x1,                                              # (K,C,C) f32
        w1=flat_conv(w1).astype(jnp.bfloat16),                    # (K,F,9*Ch)
        b1=stack("b1")[..., None],                                # (K,F,1)
        w2=w2.astype(jnp.bfloat16),                               # (K,F,F)
        b2=stack("b2")[..., None],                                # (K,F,1)
        w3=flat_conv(w3).astype(jnp.bfloat16),                    # (K,C,9*F)
        b3=stack("b3")[..., None],                                # (K,C,1)
    )
    # Parameter-only logdet terms, hoisted: sum_k Hs*Ws*(sum(an_logs_k) + slogdet(W_k)).
    logdet_const = float(Hs * Ws) * jnp.sum(
        jnp.sum(an_logs, axis=-1) + jnp.linalg.slogdet(w_1x1)[1])
    return packed, logdet_const


# --------------------------------------------------------------------------
# FlowModel.forward (reverse=False)  ==  normalizing_flow
# --------------------------------------------------------------------------

def flow_model_forward(x, packed, logdet_const):
    """x: (B, C, T, H, W) NCTHW.  Returns (z, state, nll)."""
    B = x.shape[0]

    # Level 0: SqueezeTS on the t=0 slice (as in NormFlowNet.forward), then go
    # channels-first with batch+spatial flattened onto the lane axis.
    x0 = x[:, :, 0, :, :]
    z = squeeze2(x0)                                  # (B, C, Hs, Ws)
    _, C, Hs, Ws = z.shape
    Ch = C // 2
    K, F, _ = packed["w2"].shape
    rows = B * Hs * Ws                                # 128 at the demo sizes

    z_cf = jnp.transpose(z, (1, 0, 2, 3)).reshape(C, rows)

    # 3x3-conv border-validity masks per tap (geometry only) — hoisted.
    ii = (jnp.arange(rows) // Ws) % Hs
    jj = jnp.arange(rows) % Ws
    masks = []
    for t in range(9):
        ri, rj = t // 3 - 1, t % 3 - 1
        valid = (ii + ri >= 0) & (ii + ri < Hs) & (jj + rj >= 0) & (jj + rj < Ws)
        masks.append(valid)
    mask = jnp.stack(masks).astype(jnp.float32)       # (9, rows)

    kernel = functools.partial(_fused_flow_kernel, Ws=Ws, Ch=Ch)

    z_out, ld, lp = pl.pallas_call(
        kernel,
        out_shape=(
            jax.ShapeDtypeStruct((C, rows), jnp.float32),
            jax.ShapeDtypeStruct((1, rows), jnp.float32),
            jax.ShapeDtypeStruct((1, rows), jnp.float32),
        ),
        grid=(K,),
        in_specs=[
            pl.BlockSpec((9, rows), lambda k: (0, 0)),              # masks (const)
            pl.BlockSpec((C, rows), lambda k: (0, 0)),              # z_in (const)
            pl.BlockSpec((None, C, 1), lambda k: (k, 0, 0)),        # an_bias
            pl.BlockSpec((None, C, 1), lambda k: (k, 0, 0)),        # an_scale
            pl.BlockSpec((None, C, C), lambda k: (k, 0, 0)),        # w_1x1 (f32)
            pl.BlockSpec((None, F, 9 * Ch), lambda k: (k, 0, 0)),   # w1 (bf16)
            pl.BlockSpec((None, F, 1), lambda k: (k, 0, 0)),        # b1
            pl.BlockSpec((None, F, F), lambda k: (k, 0, 0)),        # w2 (bf16)
            pl.BlockSpec((None, F, 1), lambda k: (k, 0, 0)),        # b2
            pl.BlockSpec((None, C, 9 * F), lambda k: (k, 0, 0)),    # w3 (bf16)
            pl.BlockSpec((None, C, 1), lambda k: (k, 0, 0)),        # b3
        ],
        out_specs=(
            pl.BlockSpec((C, rows), lambda k: (0, 0)),
            pl.BlockSpec((1, rows), lambda k: (0, 0)),
            pl.BlockSpec((1, rows), lambda k: (0, 0)),
        ),
        scratch_shapes=[
            pltpu.VMEM((C, rows), jnp.float32),                     # resident z
            pltpu.VMEM((Ch, rows), jnp.float32),                    # logscale acc
        ],
        compiler_params=pltpu.CompilerParams(
            dimension_semantics=("arbitrary",)),
    )(mask, z_cf, packed["an_bias"], packed["an_scale"], packed["w_1x1"],
      packed["w1"], packed["b1"], packed["w2"], packed["b2"],
      packed["w3"], packed["b3"])

    # Per-batch reductions of the lane-dense per-position outputs (tiny).
    logdet = ld.reshape(B, Hs * Ws).sum(axis=-1) + logdet_const
    logpz = lp.reshape(B, Hs * Ws).sum(axis=-1) - 0.5 * (Hs * Ws * C) * _LOG_2PI
    nll = -(logdet + logpz)

    z_nchw = jnp.transpose(z_out.reshape(C, B, Hs, Ws), (1, 0, 2, 3))
    z_nchw = z_nchw[:, :, None, :, :]                 # (B, C, 1, Hs, Ws)
    return z_nchw, None, nll


# --------------------------------------------------------------------------
# main
# --------------------------------------------------------------------------

if __name__ == "__main__":
    B, C0, T, H, W = 2, 4, 1, 16, 16     # bsz=2, input_shape=(4,16,16), lag_len=1
    K = 2                                # flow steps (L=1 level)
    FILTER_SIZE = 32

    key = jax.random.PRNGKey(0)
    kx, kp = jax.random.split(key)
    x = jax.random.normal(kx, (B, C0, T, H, W), jnp.float32)

    raw_params = init_params(kp, 4 * C0, FILTER_SIZE, K)
    packed, logdet_const = prepare_flow_params(raw_params, H // 2, W // 2)

    fwd = jax.jit(flow_model_forward)
    z, state, nll = fwd(x, packed, logdet_const)
    jax.block_until_ready((z, nll))

    assert z.shape == (B, 4 * C0, 1, H // 2, W // 2)
    assert nll.shape == (B,)
    assert bool(jnp.all(jnp.isfinite(z))) and bool(jnp.all(jnp.isfinite(nll)))
    print("KERNEL_OK")
</pallas_src>

<mosaic_0001>
module attributes {stable_mosaic.version = 11 : i64} {
  func.func @_fused_flow_kernel(%arg0: i32, %arg1: memref<9x128xf32, #tpu.memory_space<vmem>>, %arg2: memref<16x128xf32, #tpu.memory_space<vmem>>, %arg3: memref<1x16x1xf32, #tpu.memory_space<vmem>>, %arg4: memref<1x16x1xf32, #tpu.memory_space<vmem>>, %arg5: memref<1x16x16xf32, #tpu.memory_space<vmem>>, %arg6: memref<1x32x72xbf16, #tpu.memory_space<vmem>>, %arg7: memref<1x32x1xf32, #tpu.memory_space<vmem>>, %arg8: memref<1x32x32xbf16, #tpu.memory_space<vmem>>, %arg9: memref<1x32x1xf32, #tpu.memory_space<vmem>>, %arg10: memref<1x16x288xbf16, #tpu.memory_space<vmem>>, %arg11: memref<1x16x1xf32, #tpu.memory_space<vmem>>, %arg12: memref<16x128xf32, #tpu.memory_space<vmem>>, %arg13: memref<1x128xf32, #tpu.memory_space<vmem>>, %arg14: memref<1x128xf32, #tpu.memory_space<vmem>>, %arg15: memref<16x128xf32, #tpu.memory_space<vmem>>, %arg16: memref<8x128xf32, #tpu.memory_space<vmem>>) attributes {dimension_semantics = [#tpu.dimension_semantics<arbitrary>], iteration_bounds = array<i64: 2>, scalar_prefetch = 0 : i64, scratch_operands = 2 : i64, tpu.core_type = #tpu.core_type<tc>, window_params = [{pipeline_mode = #tpu.pipeline_mode<synchronous>, transform_indices = @transform_0, window_bounds = array<i64: 9, 128>}, {pipeline_mode = #tpu.pipeline_mode<synchronous>, transform_indices = @transform_1, window_bounds = array<i64: 16, 128>}, {transform_indices = @transform_2, window_bounds = array<i64: 1, 16, 1>}, {transform_indices = @transform_3, window_bounds = array<i64: 1, 16, 1>}, {transform_indices = @transform_4, window_bounds = array<i64: 1, 16, 16>}, {transform_indices = @transform_5, window_bounds = array<i64: 1, 32, 72>}, {transform_indices = @transform_6, window_bounds = array<i64: 1, 32, 1>}, {transform_indices = @transform_7, window_bounds = array<i64: 1, 32, 32>}, {transform_indices = @transform_8, window_bounds = array<i64: 1, 32, 1>}, {transform_indices = @transform_9, window_bounds = array<i64: 1, 16, 288>}, {transform_indices = @transform_10, window_bounds = array<i64: 1, 16, 1>}, {pipeline_mode = #tpu.pipeline_mode<synchronous>, transform_indices = @transform_11, window_bounds = array<i64: 16, 128>}, {pipeline_mode = #tpu.pipeline_mode<synchronous>, transform_indices = @transform_12, window_bounds = array<i64: 1, 128>}, {pipeline_mode = #tpu.pipeline_mode<synchronous>, transform_indices = @transform_13, window_bounds = array<i64: 1, 128>}]} {
    %c0_i32 = arith.constant 0 : i32
    %0 = arith.cmpi eq, %arg0, %c0_i32 : i32
    %1 = arith.extui %0 : i1 to i32
    %c0_i32_0 = arith.constant 0 : i32
    %2 = arith.cmpi ne, %1, %c0_i32_0 : i32
    scf.if %2 {
      %c0_83 = arith.constant 0 : index
      %c0_84 = arith.constant 0 : index
      %143 = vector.load %arg2[%c0_83, %c0_84] : memref<16x128xf32, #tpu.memory_space<vmem>>, vector<16x128xf32>
      %c0_85 = arith.constant 0 : index
      %c0_86 = arith.constant 0 : index
      %144 = vector.load %arg15[%c0_85, %c0_86] : memref<16x128xf32, #tpu.memory_space<vmem>>, vector<16x128xf32>
      tpu.vector_store %arg15[%c0_85, %c0_86], %143 {strides = array<i32>} : memref<16x128xf32, #tpu.memory_space<vmem>>, vector<16x128xf32>,
      %cst_87 = arith.constant 0.000000e+00 : f32
      %145 = vector.broadcast %cst_87 : f32 to vector<8x128xf32>
      %c0_88 = arith.constant 0 : index
      %c0_89 = arith.constant 0 : index
      %146 = vector.load %arg16[%c0_88, %c0_89] : memref<8x128xf32, #tpu.memory_space<vmem>>, vector<8x128xf32>
      tpu.vector_store %arg16[%c0_88, %c0_89], %145 {strides = array<i32>} : memref<8x128xf32, #tpu.memory_space<vmem>>, vector<8x128xf32>,
    } else {
    }
    %c0 = arith.constant 0 : index
    %c0_1 = arith.constant 0 : index
    %3 = vector.load %arg15[%c0, %c0_1] : memref<16x128xf32, #tpu.memory_space<vmem>>, vector<16x128xf32>
    %c0_2 = arith.constant 0 : index
    %c0_3 = arith.constant 0 : index
    %c0_4 = arith.constant 0 : index
    %4 = vector.load %arg3[%c0_2, %c0_3, %c0_4] : memref<1x16x1xf32, #tpu.memory_space<vmem>>, vector<1x16x1xf32>
    %5 = vector.shape_cast %4 : vector<1x16x1xf32> to vector<16x1xf32>
    %6 = vector.broadcast %5 : vector<16x1xf32> to vector<16x128xf32>
    %7 = arith.addf %3, %6 : vector<16x128xf32>
    %c0_5 = arith.constant 0 : index
    %c0_6 = arith.constant 0 : index
    %c0_7 = arith.constant 0 : index
    %8 = vector.load %arg4[%c0_5, %c0_6, %c0_7] : memref<1x16x1xf32, #tpu.memory_space<vmem>>, vector<1x16x1xf32>
    %9 = vector.shape_cast %8 : vector<1x16x1xf32> to vector<16x1xf32>
    %10 = vector.broadcast %9 : vector<16x1xf32> to vector<16x128xf32>
    %11 = arith.mulf %7, %10 : vector<16x128xf32>
    %c0_8 = arith.constant 0 : index
    %c0_9 = arith.constant 0 : index
    %c0_10 = arith.constant 0 : index
    %12 = vector.load %arg5[%c0_8, %c0_9, %c0_10] : memref<1x16x16xf32, #tpu.memory_space<vmem>>, vector<1x16x16xf32>
    %13 = vector.shape_cast %12 : vector<1x16x16xf32> to vector<16x16xf32>
    %cst = arith.constant dense<0.000000e+00> : vector<16x128xf32>
    %14 = tpu.matmul %13, %11, %cst {dimension_numbers = #tpu.dot_dimension_numbers<[1], [0], [0], [1], [0, 0, 1, 1], [], []>} : vector<16x16xf32>, vector<16x128xf32>, vector<16x128xf32> -> vector<16x128xf32>
    %15 = vector.extract_strided_slice %14 {offsets = [0, 0], sizes = [8, 128], strides = [1, 1]} : vector<16x128xf32> to vector<8x128xf32>
    %16 = vector.extract_strided_slice %14 {offsets = [8, 0], sizes = [8, 128], strides = [1, 1]} : vector<16x128xf32> to vector<8x128xf32>
    %c9_i32 = arith.constant 9 : i32
    %17 = tpu.dynamic_rotate %15 by %c9_i32 dim 1 : vector<8x128xf32>, i32 -> vector<8x128xf32>
    %c0_11 = arith.constant 0 : index
    %c0_12 = arith.constant 0 : index
    %18 = vector.load %arg1[%c0_11, %c0_12] : memref<9x128xf32, #tpu.memory_space<vmem>>, vector<1x128xf32>
    %19 = vector.broadcast %18 : vector<1x128xf32> to vector<8x128xf32>
    %20 = arith.mulf %17, %19 : vector<8x128xf32>
    %c8_i32 = arith.constant 8 : i32
    %21 = tpu.dynamic_rotate %15 by %c8_i32 dim 1 : vector<8x128xf32>, i32 -> vector<8x128xf32>
    %c1 = arith.constant 1 : index
    %c0_13 = arith.constant 0 : index
    %22 = vector.load %arg1[%c1, %c0_13] : memref<9x128xf32, #tpu.memory_space<vmem>>, vector<1x128xf32>
    %23 = vector.broadcast %22 : vector<1x128xf32> to vector<8x128xf32>
    %24 = arith.mulf %21, %23 : vector<8x128xf32>
    %c7_i32 = arith.constant 7 : i32
    %25 = tpu.dynamic_rotate %15 by %c7_i32 dim 1 : vector<8x128xf32>, i32 -> vector<8x128xf32>
    %c2 = arith.constant 2 : index
    %c0_14 = arith.constant 0 : index
    %26 = vector.load %arg1[%c2, %c0_14] : memref<9x128xf32, #tpu.memory_space<vmem>>, vector<1x128xf32>
    %27 = vector.broadcast %26 : vector<1x128xf32> to vector<8x128xf32>
    %28 = arith.mulf %25, %27 : vector<8x128xf32>
    %c1_i32 = arith.constant 1 : i32
    %29 = tpu.dynamic_rotate %15 by %c1_i32 dim 1 : vector<8x128xf32>, i32 -> vector<8x128xf32>
    %c3 = arith.constant 3 : index
    %c0_15 = arith.constant 0 : index
    %30 = vector.load %arg1[%c3, %c0_15] : memref<9x128xf32, #tpu.memory_space<vmem>>, vector<1x128xf32>
    %31 = vector.broadcast %30 : vector<1x128xf32> to vector<8x128xf32>
    %32 = arith.mulf %29, %31 : vector<8x128xf32>
    %c127_i32 = arith.constant 127 : i32
    %33 = tpu.dynamic_rotate %15 by %c127_i32 dim 1 : vector<8x128xf32>, i32 -> vector<8x128xf32>
    %c5 = arith.constant 5 : index
    %c0_16 = arith.constant 0 : index
    %34 = vector.load %arg1[%c5, %c0_16] : memref<9x128xf32, #tpu.memory_space<vmem>>, vector<1x128xf32>
    %35 = vector.broadcast %34 : vector<1x128xf32> to vector<8x128xf32>
    %36 = arith.mulf %33, %35 : vector<8x128xf32>
    %c121_i32 = arith.constant 121 : i32
    %37 = tpu.dynamic_rotate %15 by %c121_i32 dim 1 : vector<8x128xf32>, i32 -> vector<8x128xf32>
    %c6 = arith.constant 6 : index
    %c0_17 = arith.constant 0 : index
    %38 = vector.load %arg1[%c6, %c0_17] : memref<9x128xf32, #tpu.memory_space<vmem>>, vector<1x128xf32>
    %39 = vector.broadcast %38 : vector<1x128xf32> to vector<8x128xf32>
    %40 = arith.mulf %37, %39 : vector<8x128xf32>
    %c120_i32 = arith.constant 120 : i32
    %41 = tpu.dynamic_rotate %15 by %c120_i32 dim 1 : vector<8x128xf32>, i32 -> vector<8x128xf32>
    %c7 = arith.constant 7 : index
    %c0_18 = arith.constant 0 : index
    %42 = vector.load %arg1[%c7, %c0_18] : memref<9x128xf32, #tpu.memory_space<vmem>>, vector<1x128xf32>
    %43 = vector.broadcast %42 : vector<1x128xf32> to vector<8x128xf32>
    %44 = arith.mulf %41, %43 : vector<8x128xf32>
    %c119_i32 = arith.constant 119 : i32
    %45 = tpu.dynamic_rotate %15 by %c119_i32 dim 1 : vector<8x128xf32>, i32 -> vector<8x128xf32>
    %c8 = arith.constant 8 : index
    %c0_19 = arith.constant 0 : index
    %46 = vector.load %arg1[%c8, %c0_19] : memref<9x128xf32, #tpu.memory_space<vmem>>, vector<1x128xf32>
    %47 = vector.broadcast %46 : vector<1x128xf32> to vector<8x128xf32>
    %48 = arith.mulf %45, %47 : vector<8x128xf32>
    %49 = tpu.concatenate %20, %24, %28, %32, %15, %36, %40, %44, %48 in 0 : vector<8x128xf32>, vector<8x128xf32>, vector<8x128xf32>, vector<8x128xf32>, vector<8x128xf32>, vector<8x128xf32>, vector<8x128xf32>, vector<8x128xf32>, vector<8x128xf32> -> vector<72x128xf32>
    %c0_20 = arith.constant 0 : index
    %c0_21 = arith.constant 0 : index
    %c0_22 = arith.constant 0 : index
    %50 = vector.load %arg6[%c0_20, %c0_21, %c0_22] : memref<1x32x72xbf16, #tpu.memory_space<vmem>>, vector<1x32x72xbf16>
    %51 = vector.shape_cast %50 : vector<1x32x72xbf16> to vector<32x72xbf16>
    %52 = arith.truncf %49 : vector<72x128xf32> to vector<72x128xbf16>
    %cst_23 = arith.constant dense<0.000000e+00> : vector<32x128xf32>
    %53 = tpu.matmul %51, %52, %cst_23 {dimension_numbers = #tpu.dot_dimension_numbers<[1], [0], [0], [1], [0, 0, 1, 1], [], []>} : vector<32x72xbf16>, vector<72x128xbf16>, vector<32x128xf32> -> vector<32x128xf32>
    %c0_24 = arith.constant 0 : index
    %c0_25 = arith.constant 0 : index
    %c0_26 = arith.constant 0 : index
    %54 = vector.load %arg7[%c0_24, %c0_25, %c0_26] : memref<1x32x1xf32, #tpu.memory_space<vmem>>, vector<1x32x1xf32>
    %55 = vector.shape_cast %54 : vector<1x32x1xf32> to vector<32x1xf32>
    %56 = vector.broadcast %55 : vector<32x1xf32> to vector<32x128xf32>
    %57 = arith.addf %53, %56 : vector<32x128xf32>
    %cst_27 = arith.constant 0.000000e+00 : f32
    %58 = vector.broadcast %cst_27 : f32 to vector<32x128xf32>
    %59 = arith.maximumf %57, %58 : vector<32x128xf32>
    %c0_28 = arith.constant 0 : index
    %c0_29 = arith.constant 0 : index
    %c0_30 = arith.constant 0 : index
    %60 = vector.load %arg8[%c0_28, %c0_29, %c0_30] : memref<1x32x32xbf16, #tpu.memory_space<vmem>>, vector<1x32x32xbf16>
    %61 = vector.shape_cast %60 : vector<1x32x32xbf16> to vector<32x32xbf16>
    %62 = arith.truncf %59 : vector<32x128xf32> to vector<32x128xbf16>
    %cst_31 = arith.constant dense<0.000000e+00> : vector<32x128xf32>
    %63 = tpu.matmul %61, %62, %cst_31 {dimension_numbers = #tpu.dot_dimension_numbers<[1], [0], [0], [1], [0, 0, 1, 1], [], []>} : vector<32x32xbf16>, vector<32x128xbf16>, vector<32x128xf32> -> vector<32x128xf32>
    %c0_32 = arith.constant 0 : index
    %c0_33 = arith.constant 0 : index
    %c0_34 = arith.constant 0 : index
    %64 = vector.load %arg9[%c0_32, %c0_33, %c0_34] : memref<1x32x1xf32, #tpu.memory_space<vmem>>, vector<1x32x1xf32>
    %65 = vector.shape_cast %64 : vector<1x32x1xf32> to vector<32x1xf32>
    %66 = vector.broadcast %65 : vector<32x1xf32> to vector<32x128xf32>
    %67 = arith.addf %63, %66 : vector<32x128xf32>
    %cst_35 = arith.constant 0.000000e+00 : f32
    %68 = vector.broadcast %cst_35 : f32 to vector<32x128xf32>
    %69 = arith.maximumf %67, %68 : vector<32x128xf32>
    %c9_i32_36 = arith.constant 9 : i32
    %70 = tpu.dynamic_rotate %69 by %c9_i32_36 dim 1 : vector<32x128xf32>, i32 -> vector<32x128xf32>
    %c0_37 = arith.constant 0 : index
    %c0_38 = arith.constant 0 : index
    %71 = vector.load %arg1[%c0_37, %c0_38] : memref<9x128xf32, #tpu.memory_space<vmem>>, vector<1x128xf32>
    %72 = vector.broadcast %71 : vector<1x128xf32> to vector<32x128xf32>
    %73 = arith.mulf %70, %72 : vector<32x128xf32>
    %c8_i32_39 = arith.constant 8 : i32
    %74 = tpu.dynamic_rotate %69 by %c8_i32_39 dim 1 : vector<32x128xf32>, i32 -> vector<32x128xf32>
    %c1_40 = arith.constant 1 : index
    %c0_41 = arith.constant 0 : index
    %75 = vector.load %arg1[%c1_40, %c0_41] : memref<9x128xf32, #tpu.memory_space<vmem>>, vector<1x128xf32>
    %76 = vector.broadcast %75 : vector<1x128xf32> to vector<32x128xf32>
    %77 = arith.mulf %74, %76 : vector<32x128xf32>
    %c7_i32_42 = arith.constant 7 : i32
    %78 = tpu.dynamic_rotate %69 by %c7_i32_42 dim 1 : vector<32x128xf32>, i32 -> vector<32x128xf32>
    %c2_43 = arith.constant 2 : index
    %c0_44 = arith.constant 0 : index
    %79 = vector.load %arg1[%c2_43, %c0_44] : memref<9x128xf32, #tpu.memory_space<vmem>>, vector<1x128xf32>
    %80 = vector.broadcast %79 : vector<1x128xf32> to vector<32x128xf32>
    %81 = arith.mulf %78, %80 : vector<32x128xf32>
    %c1_i32_45 = arith.constant 1 : i32
    %82 = tpu.dynamic_rotate %69 by %c1_i32_45 dim 1 : vector<32x128xf32>, i32 -> vector<32x128xf32>
    %c3_46 = arith.constant 3 : index
    %c0_47 = arith.constant 0 : index
    %83 = vector.load %arg1[%c3_46, %c0_47] : memref<9x128xf32, #tpu.memory_space<vmem>>, vector<1x128xf32>
    %84 = vector.broadcast %83 : vector<1x128xf32> to vector<32x128xf32>
    %85 = arith.mulf %82, %84 : vector<32x128xf32>
    %c127_i32_48 = arith.constant 127 : i32
    %86 = tpu.dynamic_rotate %69 by %c127_i32_48 dim 1 : vector<32x128xf32>, i32 -> vector<32x128xf32>
    %c5_49 = arith.constant 5 : index
    %c0_50 = arith.constant 0 : index
    %87 = vector.load %arg1[%c5_49, %c0_50] : memref<9x128xf32, #tpu.memory_space<vmem>>, vector<1x128xf32>
    %88 = vector.broadcast %87 : vector<1x128xf32> to vector<32x128xf32>
    %89 = arith.mulf %86, %88 : vector<32x128xf32>
    %c121_i32_51 = arith.constant 121 : i32
    %90 = tpu.dynamic_rotate %69 by %c121_i32_51 dim 1 : vector<32x128xf32>, i32 -> vector<32x128xf32>
    %c6_52 = arith.constant 6 : index
    %c0_53 = arith.constant 0 : index
    %91 = vector.load %arg1[%c6_52, %c0_53] : memref<9x128xf32, #tpu.memory_space<vmem>>, vector<1x128xf32>
    %92 = vector.broadcast %91 : vector<1x128xf32> to vector<32x128xf32>
    %93 = arith.mulf %90, %92 : vector<32x128xf32>
    %c120_i32_54 = arith.constant 120 : i32
    %94 = tpu.dynamic_rotate %69 by %c120_i32_54 dim 1 : vector<32x128xf32>, i32 -> vector<32x128xf32>
    %c7_55 = arith.constant 7 : index
    %c0_56 = arith.constant 0 : index
    %95 = vector.load %arg1[%c7_55, %c0_56] : memref<9x128xf32, #tpu.memory_space<vmem>>, vector<1x128xf32>
    %96 = vector.broadcast %95 : vector<1x128xf32> to vector<32x128xf32>
    %97 = arith.mulf %94, %96 : vector<32x128xf32>
    %c119_i32_57 = arith.constant 119 : i32
    %98 = tpu.dynamic_rotate %69 by %c119_i32_57 dim 1 : vector<32x128xf32>, i32 -> vector<32x128xf32>
    %c8_58 = arith.constant 8 : index
    %c0_59 = arith.constant 0 : index
    %99 = vector.load %arg1[%c8_58, %c0_59] : memref<9x128xf32, #tpu.memory_space<vmem>>, vector<1x128xf32>
    %100 = vector.broadcast %99 : vector<1x128xf32> to vector<32x128xf32>
    %101 = arith.mulf %98, %100 : vector<32x128xf32>
    %102 = tpu.concatenate %73, %77, %81, %85, %69, %89, %93, %97, %101 in 0 : vector<32x128xf32>, vector<32x128xf32>, vector<32x128xf32>, vector<32x128xf32>, vector<32x128xf32>, vector<32x128xf32>, vector<32x128xf32>, vector<32x128xf32>, vector<32x128xf32> -> vector<288x128xf32>
    %c0_60 = arith.constant 0 : index
    %c0_61 = arith.constant 0 : index
    %c0_62 = arith.constant 0 : index
    %103 = vector.load %arg10[%c0_60, %c0_61, %c0_62] : memref<1x16x288xbf16, #tpu.memory_space<vmem>>, vector<1x16x288xbf16>
    %104 = vector.shape_cast %103 : vector<1x16x288xbf16> to vector<16x288xbf16>
    %105 = arith.truncf %102 : vector<288x128xf32> to vector<288x128xbf16>
    %cst_63 = arith.constant dense<0.000000e+00> : vector<16x128xf32>
    %106 = tpu.matmul %104, %105, %cst_63 {dimension_numbers = #tpu.dot_dimension_numbers<[1], [0], [0], [1], [0, 0, 1, 1], [], []>} : vector<16x288xbf16>, vector<288x128xbf16>, vector<16x128xf32> -> vector<16x128xf32>
    %c0_64 = arith.constant 0 : index
    %c0_65 = arith.constant 0 : index
    %c0_66 = arith.constant 0 : index
    %107 = vector.load %arg11[%c0_64, %c0_65, %c0_66] : memref<1x16x1xf32, #tpu.memory_space<vmem>>, vector<1x16x1xf32>
    %108 = vector.shape_cast %107 : vector<1x16x1xf32> to vector<16x1xf32>
    %109 = vector.broadcast %108 : vector<16x1xf32> to vector<16x128xf32>
    %110 = arith.addf %106, %109 : vector<16x128xf32>
    %111 = vector.extract_strided_slice %110 {offsets = [0, 0], sizes = [8, 128], strides = [1, 1]} : vector<16x128xf32> to vector<8x128xf32>
    %112 = vector.extract_strided_slice %110 {offsets = [8, 0], sizes = [8, 128], strides = [1, 1]} : vector<16x128xf32> to vector<8x128xf32>
    %cst_67 = arith.constant 2.000000e+00 : f32
    %113 = vector.broadcast %cst_67 : f32 to vector<8x128xf32>
    %114 = arith.addf %112, %113 : vector<8x128xf32>
    %cst_68 = arith.constant 0.000000e+00 : f32
    %115 = vector.broadcast %cst_68 : f32 to vector<8x128xf32>
    %116 = arith.subf %115, %114 : vector<8x128xf32>
    %cst_69 = arith.constant 0.000000e+00 : f32
    %117 = vector.broadcast %cst_69 : f32 to vector<8x128xf32>
    %118 = arith.maximumf %116, %117 : vector<8x128xf32>
    %cst_70 = arith.constant 0.000000e+00 : f32
    %119 = vector.broadcast %cst_70 : f32 to vector<8x128xf32>
    %120 = arith.subf %119, %114 : vector<8x128xf32>
    %121 = arith.subf %120, %118 : vector<8x128xf32>
    %122 = math.exp %121 : vector<8x128xf32>
    %cst_71 = arith.constant 0.000000e+00 : f32
    %123 = vector.broadcast %cst_71 : f32 to vector<8x128xf32>
    %124 = arith.subf %123, %118 : vector<8x128xf32>
    %125 = math.exp %124 : vector<8x128xf32>
    %126 = arith.addf %125, %122 : vector<8x128xf32>
    %127 = math.log %126 : vector<8x128xf32>
    %128 = arith.addf %118, %127 : vector<8x128xf32>
    %cst_72 = arith.constant 0.000000e+00 : f32
    %129 = vector.broadcast %cst_72 : f32 to vector<8x128xf32>
    %130 = arith.subf %129, %128 : vector<8x128xf32>
    %131 = tpu.reciprocal %126 {approx = true} : vector<8x128xf32> -> vector<8x128xf32>
    %132 = arith.mulf %125, %131 : vector<8x128xf32>
    %133 = arith.addf %16, %111 : vector<8x128xf32>
    %134 = arith.mulf %133, %132 : vector<8x128xf32>
    %c0_73 = arith.constant 0 : index
    %c0_74 = arith.constant 0 : index
    %135 = vector.load %arg16[%c0_73, %c0_74] : memref<8x128xf32, #tpu.memory_space<vmem>>, vector<8x128xf32>
    %136 = arith.addf %135, %130 : vector<8x128xf32>
    %c0_75 = arith.constant 0 : index
    %c0_76 = arith.constant 0 : index
    %137 = vector.load %arg16[%c0_75, %c0_76] : memref<8x128xf32, #tpu.memory_space<vmem>>, vector<8x128xf32>
    tpu.vector_store %arg16[%c0_75, %c0_76], %136 {strides = array<i32>} : memref<8x128xf32, #tpu.memory_space<vmem>>, vector<8x128xf32>,
    %c0_77 = arith.constant 0 : index
    %c0_78 = arith.constant 0 : index
    %138 = vector.load %arg15[%c0_77, %c0_78] : memref<16x128xf32, #tpu.memory_space<vmem>>, vector<8x128xf32>
    tpu.vector_store %arg15[%c0_77, %c0_78], %15 {strides = array<i32>} : memref<16x128xf32, #tpu.memory_space<vmem>>, vector<8x128xf32>,
    %c8_79 = arith.constant 8 : index
    %c0_80 = arith.constant 0 : index
    %139 = vector.load %arg15[%c8_79, %c0_80] : memref<16x128xf32, #tpu.memory_space<vmem>>, vector<8x128xf32>
    tpu.vector_store %arg15[%c8_79, %c0_80], %134 {strides = array<i32>} : memref<16x128xf32, #tpu.memory_space<vmem>>, vector<8x128xf32>,
    %c1_i32_81 = arith.constant 1 : i32
    %140 = arith.cmpi eq, %arg0, %c1_i32_81 : i32
    %141 = arith.extui %140 : i1 to i32
    %c0_i32_82 = arith.constant 0 : i32
    %142 = arith.cmpi ne, %141, %c0_i32_82 : i32
    scf.if %142 {
      %c0_83 = arith.constant 0 : index
      %c0_84 = arith.constant 0 : index
      %143 = vector.load %arg15[%c0_83, %c0_84] : memref<16x128xf32, #tpu.memory_space<vmem>>, vector<16x128xf32>
      %c0_85 = arith.constant 0 : index
      %c0_86 = arith.constant 0 : index
      %144 = vector.load %arg12[%c0_85, %c0_86] : memref<16x128xf32, #tpu.memory_space<vmem>>, vector<16x128xf32>
      tpu.vector_store %arg12[%c0_85, %c0_86], %143 {strides = array<i32>} : memref<16x128xf32, #tpu.memory_space<vmem>>, vector<16x128xf32>,
      %c0_87 = arith.constant 0 : index
      %c0_88 = arith.constant 0 : index
      %145 = vector.load %arg16[%c0_87, %c0_88] : memref<8x128xf32, #tpu.memory_space<vmem>>, vector<8x128xf32>
      %cst_89 = arith.constant dense<0.000000e+00> : vector<128xf32>
      %146 = vector.multi_reduction <add>, %145, %cst_89 [0] : vector<8x128xf32> to vector<128xf32>
      %147 = vector.shape_cast %146 : vector<128xf32> to vector<1x128xf32>
      %c0_90 = arith.constant 0 : index
      %c0_91 = arith.constant 0 : index
      %148 = vector.load %arg13[%c0_90, %c0_91] : memref<1x128xf32, #tpu.memory_space<vmem>>, vector<1x128xf32>
      tpu.vector_store %arg13[%c0_90, %c0_91], %147 {strides = array<i32>} : memref<1x128xf32, #tpu.memory_space<vmem>>, vector<1x128xf32>,
      %cst_92 = arith.constant -5.000000e-01 : f32
      %149 = vector.broadcast %cst_92 : f32 to vector<16x128xf32>
      %150 = arith.mulf %149, %143 : vector<16x128xf32>
      %151 = arith.mulf %150, %143 : vector<16x128xf32>
      %cst_93 = arith.constant dense<0.000000e+00> : vector<128xf32>
      %152 = vector.multi_reduction <add>, %151, %cst_93 [0] : vector<16x128xf32> to vector<128xf32>
      %153 = vector.shape_cast %152 : vector<128xf32> to vector<1x128xf32>
      %c0_94 = arith.constant 0 : index
      %c0_95 = arith.constant 0 : index
      %154 = vector.load %arg14[%c0_94, %c0_95] : memref<1x128xf32, #tpu.memory_space<vmem>>, vector<1x128xf32>
      tpu.vector_store %arg14[%c0_94, %c0_95], %153 {strides = array<i32>} : memref<1x128xf32, #tpu.memory_space<vmem>>, vector<1x128xf32>,
    } else {
    }
    return
  }
  func.func @transform_0(%arg0: i32) -> (i32, i32) {
    %c0_i32 = arith.constant 0 : i32
    %c0_i32_0 = arith.constant 0 : i32
    %c0_i32_1 = arith.constant 0 : i32
    return %c0_i32, %c0_i32_0 : i32, i32
  }
  func.func @transform_1(%arg0: i32) -> (i32, i32) {
    %c0_i32 = arith.constant 0 : i32
    %c0_i32_0 = arith.constant 0 : i32
    %c0_i32_1 = arith.constant 0 : i32
    return %c0_i32, %c0_i32_0 : i32, i32
  }
  func.func @transform_2(%arg0: i32) -> (i32, i32, i32) {
    %c0_i32 = arith.constant 0 : i32
    %c0_i32_0 = arith.constant 0 : i32
    %c0_i32_1 = arith.constant 0 : i32
    return %arg0, %c0_i32, %c0_i32_0 : i32, i32, i32
  }
  func.func @transform_3(%arg0: i32) -> (i32, i32, i32) {
    %c0_i32 = arith.constant 0 : i32
    %c0_i32_0 = arith.constant 0 : i32
    %c0_i32_1 = arith.constant 0 : i32
    return %arg0, %c0_i32, %c0_i32_0 : i32, i32, i32
  }
  func.func @transform_4(%arg0: i32) -> (i32, i32, i32) {
    %c0_i32 = arith.constant 0 : i32
    %c0_i32_0 = arith.constant 0 : i32
    %c0_i32_1 = arith.constant 0 : i32
    return %arg0, %c0_i32, %c0_i32_0 : i32, i32, i32
  }
  func.func @transform_5(%arg0: i32) -> (i32, i32, i32) {
    %c0_i32 = arith.constant 0 : i32
    %c0_i32_0 = arith.constant 0 : i32
    %c0_i32_1 = arith.constant 0 : i32
    return %arg0, %c0_i32, %c0_i32_0 : i32, i32, i32
  }
  func.func @transform_6(%arg0: i32) -> (i32, i32, i32) {
    %c0_i32 = arith.constant 0 : i32
    %c0_i32_0 = arith.constant 0 : i32
    %c0_i32_1 = arith.constant 0 : i32
    return %arg0, %c0_i32, %c0_i32_0 : i32, i32, i32
  }
  func.func @transform_7(%arg0: i32) -> (i32, i32, i32) {
    %c0_i32 = arith.constant 0 : i32
    %c0_i32_0 = arith.constant 0 : i32
    %c0_i32_1 = arith.constant 0 : i32
    return %arg0, %c0_i32, %c0_i32_0 : i32, i32, i32
  }
  func.func @transform_8(%arg0: i32) -> (i32, i32, i32) {
    %c0_i32 = arith.constant 0 : i32
    %c0_i32_0 = arith.constant 0 : i32
    %c0_i32_1 = arith.constant 0 : i32
    return %arg0, %c0_i32, %c0_i32_0 : i32, i32, i32
  }
  func.func @transform_9(%arg0: i32) -> (i32, i32, i32) {
    %c0_i32 = arith.constant 0 : i32
    %c0_i32_0 = arith.constant 0 : i32
    %c0_i32_1 = arith.constant 0 : i32
    return %arg0, %c0_i32, %c0_i32_0 : i32, i32, i32
  }
  func.func @transform_10(%arg0: i32) -> (i32, i32, i32) {
    %c0_i32 = arith.constant 0 : i32
    %c0_i32_0 = arith.constant 0 : i32
    %c0_i32_1 = arith.constant 0 : i32
    return %arg0, %c0_i32, %c0_i32_0 : i32, i32, i32
  }
  func.func @transform_11(%arg0: i32) -> (i32, i32) {
    %c0_i32 = arith.constant 0 : i32
    %c0_i32_0 = arith.constant 0 : i32
    %c0_i32_1 = arith.constant 0 : i32
    return %c0_i32, %c0_i32_0 : i32, i32
  }
  func.func @transform_12(%arg0: i32) -> (i32, i32) {
    %c0_i32 = arith.constant 0 : i32
    %c0_i32_0 = arith.constant 0 : i32
    %c0_i32_1 = arith.constant 0 : i32
    return %c0_i32, %c0_i32_0 : i32, i32
  }
  func.func @transform_13(%arg0: i32) -> (i32, i32) {
    %c0_i32 = arith.constant 0 : i32
    %c0_i32_0 = arith.constant 0 : i32
    %c0_i32_1 = arith.constant 0 : i32
    return %c0_i32, %c0_i32_0 : i32, i32
  }
}

</mosaic_0001>

<llo_original>
// kernel: flow_model_forward.1
$region0: #{flow_model_forward.1}
  #allocation0 [shape = 'u32[]', space=smem, size = 0x4, offset = 0x4, fixed_abs, tag = 'smem constant byte address 0x4 - core index']
  #allocation1 [shape = 'u32[72,128]{1,0:T(1,128)}', space=vmem, size = 0x9000, scoped, tag = 'internal scratch']
  #allocation2 [shape = 'f32[16,128]{1,0:T(8,128)}', space=vmem, size = 0x2000, scoped, tag = 'scratch operand']
  #allocation3 [shape = 'f32[8,128]{1,0:T(8,128)}', space=vmem, size = 0x1000, scoped, tag = 'scratch operand']
  %s0 = inlined_call_operand.vmem [shape: f32[9,128], index: 0, kind: input, shape index: {}]
  %s1 = inlined_call_operand.vmem [shape: f32[16,128], index: 1, kind: input, shape index: {}]
  %s2 = inlined_call_operand.vmem [shape: f32[2,16,1], index: 2, kind: input, shape index: {}]
  %s3 = inlined_call_operand.vmem [shape: f32[2,16,1], index: 3, kind: input, shape index: {}]
  %s4 = inlined_call_operand.vmem [shape: f32[2,16,16], index: 4, kind: input, shape index: {}]
  %s5 = inlined_call_operand.vmem [shape: bf16[2,32,72], index: 5, kind: input, shape index: {}]
  %s6 = inlined_call_operand.vmem [shape: f32[2,32,1], index: 6, kind: input, shape index: {}]
  %s7 = inlined_call_operand.vmem [shape: bf16[2,32,32], index: 7, kind: input, shape index: {}]
  %s8 = inlined_call_operand.vmem [shape: f32[2,32,1], index: 8, kind: input, shape index: {}]
  %s9 = inlined_call_operand.vmem [shape: bf16[2,16,288], index: 9, kind: input, shape index: {}]
  %s10 = inlined_call_operand.vmem [shape: f32[2,16,1], index: 10, kind: input, shape index: {}]
  %s11 = inlined_call_operand.vmem [shape: f32[16,128], index: 11, kind: output, shape index: {0}]
  %s12 = inlined_call_operand.vmem [shape: f32[1,128], index: 12, kind: output, shape index: {1}]
  %s13 = inlined_call_operand.vmem [shape: f32[1,128], index: 13, kind: output, shape index: {2}]
  %14 = xla_tuple %s11, %s12, %s13
  %s15 = sld [smem:[#allocation0]]
  $region101: #{flow_model_forward.1} parent=0
    _
  %s17 = ssub.s32 1, %s15
  %s18 = scalar_select 0, %s17, %s15
  loop: start=0, step=1, limit=4
  $region2: #{flow_model_forward.1} parent=0 // loop_pre_header
    _
  $region3: #{flow_model_forward.1} parent=0 // loop_header
    %s20 = sphi 0, %s24
    %p21 = scmp.ge.s32.totalorder %s20, 4
    %s28 = sphi 0, %s28
    %s30 = sphi 0, %s28
    %s31 = sphi 0, %s30
    %s45 = sphi 0, %s31
    %s49 = sphi 0, %s49
    %s51 = sphi 0, %s49
    %s52 = sphi 0, %s51
    %s66 = sphi 0, %s52
    %s72 = sphi 0, %s74
    %s75 = sphi 0, %s72
    %s76 = sphi 0, %s75
    %s92 = sphi 0, %s76
    %s98 = sphi 0, %s100
    %s101 = sphi 0, %s98
    %s102 = sphi 0, %s101
    %s118 = sphi 0, %s102
    %s124 = sphi 0, %s126
    %s127 = sphi 0, %s124
    %s128 = sphi 0, %s127
    %s144 = sphi 0, %s128
    %s150 = sphi 0, %s152
    %s153 = sphi 0, %s150
    %s154 = sphi 0, %s153
    %s170 = sphi 0, %s154
    %s176 = sphi 0, %s178
    %s179 = sphi 0, %s176
    %s180 = sphi 0, %s179
    %s196 = sphi 0, %s180
    %s202 = sphi 0, %s204
    %s205 = sphi 0, %s202
    %s206 = sphi 0, %s205
    %s222 = sphi 0, %s206
    %s228 = sphi 0, %s230
    %s231 = sphi 0, %s228
    %s232 = sphi 0, %s231
    %s248 = sphi 0, %s232
    %s254 = sphi 0, %s256
    %s257 = sphi 0, %s254
    %s258 = sphi 0, %s257
    %s274 = sphi 0, %s258
    %s280 = sphi 0, %s282
    %s283 = sphi 0, %s280
    %s284 = sphi 0, %s283
    %s300 = sphi 0, %s284
    %s304 = sphi 0, %s304
    %s306 = sphi 0, %s304
    %s307 = sphi 0, %s306
    %s321 = sphi 0, %s307
    %s325 = sphi 0, %s325
    %s327 = sphi 0, %s325
    %s328 = sphi 0, %s327
    %s342 = sphi 0, %s328
    %s346 = sphi 0, %s346
    %s348 = sphi 0, %s346
    %s349 = sphi 0, %s348
    %s363 = sphi 0, %s349
  $region4: #{flow_model_forward.1} parent=0 // loop_header_branch
    %23 = sbr.rel (%p21) target = $region8
  $region5: #{flow_model_forward.1} parent=0 // loop_body
    %s25 = ssub.s32 %s20, 1
    %s26 = ssub.s32 %s20, 2
    %s27 = sadd.s32 %s20, 1
    %s29 = sadd.s32 %s28, 1
    %p32 = scmp.eq.s32.totalorder %s20, 1
    %p33 = scmp.ne.s32.totalorder %s28, %s30
    %p34 = scmp.eq.s32.totalorder %s20, 0
    %p35 = por %p33, %p34
    %p36 = scmp.ne.s32.totalorder %s28, %s30
    %p37 = scmp.eq.s32.totalorder %s25, 1
    %p38 = por %p36, %p37
    %p39 = scmp.ne.s32.totalorder %s30, %s31
    %p40 = scmp.eq.s32.totalorder %s25, 0
    %p41 = por %p39, %p40
    %p42 = scmp.ne.s32.totalorder %s30, %s31
    %p43 = scmp.eq.s32.totalorder %s26, 1
    %p44 = por %p42, %p43
    %p46 = scmp.ne.s32.totalorder %s31, %s45
    %p47 = scmp.eq.s32.totalorder %s26, 0
    %p48 = por %p46, %p47
    %s50 = sadd.s32 %s49, 1
    %p53 = scmp.eq.s32.totalorder %s20, 1
    %p54 = scmp.ne.s32.totalorder %s49, %s51
    %p55 = scmp.eq.s32.totalorder %s20, 0
    %p56 = por %p54, %p55
    %p57 = scmp.ne.s32.totalorder %s49, %s51
    %p58 = scmp.eq.s32.totalorder %s25, 1
    %p59 = por %p57, %p58
    %p60 = scmp.ne.s32.totalorder %s51, %s52
    %p61 = scmp.eq.s32.totalorder %s25, 0
    %p62 = por %p60, %p61
    %p63 = scmp.ne.s32.totalorder %s51, %s52
    %p64 = scmp.eq.s32.totalorder %s26, 1
    %p65 = por %p63, %p64
    %p67 = scmp.ne.s32.totalorder %s52, %s66
    %p68 = scmp.eq.s32.totalorder %s26, 0
    %p69 = por %p67, %p68
    %s70 = ssub.s32 %s20, %s27
    %p71 = scmp.eq.s32.totalorder %s70, 0
    %s73 = sadd.s32 %s72, 1
    %s74 = scalar_select %p71, %s72, %s73
    %p77 = pneg %p71
    %p78 = scmp.eq.s32.totalorder %s20, 1
    %p79 = por %p77, %p78
    %p80 = scmp.ne.s32.totalorder %s72, %s75
    %p81 = scmp.eq.s32.totalorder %s20, 0
    %p82 = por %p80, %p81
    %p83 = scmp.ne.s32.totalorder %s72, %s75
    %p84 = scmp.eq.s32.totalorder %s25, 1
    %p85 = por %p83, %p84
    %p86 = scmp.ne.s32.totalorder %s75, %s76
    %p87 = scmp.eq.s32.totalorder %s25, 0
    %p88 = por %p86, %p87
    %p89 = scmp.ne.s32.totalorder %s75, %s76
    %p90 = scmp.eq.s32.totalorder %s26, 1
    %p91 = por %p89, %p90
    %p93 = scmp.ne.s32.totalorder %s76, %s92
    %p94 = scmp.eq.s32.totalorder %s26, 0
    %p95 = por %p93, %p94
    %s96 = ssub.s32 %s20, %s27
    %p97 = scmp.eq.s32.totalorder %s96, 0
    %s99 = sadd.s32 %s98, 1
    %s100 = scalar_select %p97, %s98, %s99
    %p103 = pneg %p97
    %p104 = scmp.eq.s32.totalorder %s20, 1
    %p105 = por %p103, %p104
    %p106 = scmp.ne.s32.totalorder %s98, %s101
    %p107 = scmp.eq.s32.totalorder %s20, 0
    %p108 = por %p106, %p107
    %p109 = scmp.ne.s32.totalorder %s98, %s101
    %p110 = scmp.eq.s32.totalorder %s25, 1
    %p111 = por %p109, %p110
    %p112 = scmp.ne.s32.totalorder %s101, %s102
    %p113 = scmp.eq.s32.totalorder %s25, 0
    %p114 = por %p112, %p113
    %p115 = scmp.ne.s32.totalorder %s101, %s102
    %p116 = scmp.eq.s32.totalorder %s26, 1
    %p117 = por %p115, %p116
    %p119 = scmp.ne.s32.totalorder %s102, %s118
    %p120 = scmp.eq.s32.totalorder %s26, 0
    %p121 = por %p119, %p120
    %s122 = ssub.s32 %s20, %s27
    %p123 = scmp.eq.s32.totalorder %s122, 0
    %s125 = sadd.s32 %s124, 1
    %s126 = scalar_select %p123, %s124, %s125
    %p129 = pneg %p123
    %p130 = scmp.eq.s32.totalorder %s20, 1
    %p131 = por %p129, %p130
    %p132 = scmp.ne.s32.totalorder %s124, %s127
    %p133 = scmp.eq.s32.totalorder %s20, 0
    %p134 = por %p132, %p133
    %p135 = scmp.ne.s32.totalorder %s124, %s127
    %p136 = scmp.eq.s32.totalorder %s25, 1
    %p137 = por %p135, %p136
    %p138 = scmp.ne.s32.totalorder %s127, %s128
    %p139 = scmp.eq.s32.totalorder %s25, 0
    %p140 = por %p138, %p139
    %p141 = scmp.ne.s32.totalorder %s127, %s128
    %p142 = scmp.eq.s32.totalorder %s26, 1
    %p143 = por %p141, %p142
    %p145 = scmp.ne.s32.totalorder %s128, %s144
    %p146 = scmp.eq.s32.totalorder %s26, 0
    %p147 = por %p145, %p146
    %s148 = ssub.s32 %s20, %s27
    %p149 = scmp.eq.s32.totalorder %s148, 0
    %s151 = sadd.s32 %s150, 1
    %s152 = scalar_select %p149, %s150, %s151
    %p155 = pneg %p149
    %p156 = scmp.eq.s32.totalorder %s20, 1
    %p157 = por %p155, %p156
    %p158 = scmp.ne.s32.totalorder %s150, %s153
    %p159 = scmp.eq.s32.totalorder %s20, 0
    %p160 = por %p158, %p159
    %p161 = scmp.ne.s32.totalorder %s150, %s153
    %p162 = scmp.eq.s32.totalorder %s25, 1
    %p163 = por %p161, %p162
    %p164 = scmp.ne.s32.totalorder %s153, %s154
    %p165 = scmp.eq.s32.totalorder %s25, 0
    %p166 = por %p164, %p165
    %p167 = scmp.ne.s32.totalorder %s153, %s154
    %p168 = scmp.eq.s32.totalorder %s26, 1
    %p169 = por %p167, %p168
    %p171 = scmp.ne.s32.totalorder %s154, %s170
    %p172 = scmp.eq.s32.totalorder %s26, 0
    %p173 = por %p171, %p172
    %s174 = ssub.s32 %s20, %s27
    %p175 = scmp.eq.s32.totalorder %s174, 0
    %s177 = sadd.s32 %s176, 1
    %s178 = scalar_select %p175, %s176, %s177
    %p181 = pneg %p175
    %p182 = scmp.eq.s32.totalorder %s20, 1
    %p183 = por %p181, %p182
    %p184 = scmp.ne.s32.totalorder %s176, %s179
    %p185 = scmp.eq.s32.totalorder %s20, 0
    %p186 = por %p184, %p185
    %p187 = scmp.ne.s32.totalorder %s176, %s179
    %p188 = scmp.eq.s32.totalorder %s25, 1
    %p189 = por %p187, %p188
    %p190 = scmp.ne.s32.totalorder %s179, %s180
    %p191 = scmp.eq.s32.totalorder %s25, 0
    %p192 = por %p190, %p191
    %p193 = scmp.ne.s32.totalorder %s179, %s180
    %p194 = scmp.eq.s32.totalorder %s26, 1
    %p195 = por %p193, %p194
    %p197 = scmp.ne.s32.totalorder %s180, %s196
    %p198 = scmp.eq.s32.totalorder %s26, 0
    %p199 = por %p197, %p198
    %s200 = ssub.s32 %s20, %s27
    %p201 = scmp.eq.s32.totalorder %s200, 0
    %s203 = sadd.s32 %s202, 1
    %s204 = scalar_select %p201, %s202, %s203
    %p207 = pneg %p201
    %p208 = scmp.eq.s32.totalorder %s20, 1
    %p209 = por %p207, %p208
    %p210 = scmp.ne.s32.totalorder %s202, %s205
    %p211 = scmp.eq.s32.totalorder %s20, 0
    %p212 = por %p210, %p211
    %p213 = scmp.ne.s32.totalorder %s202, %s205
    %p214 = scmp.eq.s32.totalorder %s25, 1
    %p215 = por %p213, %p214
    %p216 = scmp.ne.s32.totalorder %s205, %s206
    %p217 = scmp.eq.s32.totalorder %s25, 0
    %p218 = por %p216, %p217
    %p219 = scmp.ne.s32.totalorder %s205, %s206
    %p220 = scmp.eq.s32.totalorder %s26, 1
    %p221 = por %p219, %p220
    %p223 = scmp.ne.s32.totalorder %s206, %s222
    %p224 = scmp.eq.s32.totalorder %s26, 0
    %p225 = por %p223, %p224
    %s226 = ssub.s32 %s20, %s27
    %p227 = scmp.eq.s32.totalorder %s226, 0
    %s229 = sadd.s32 %s228, 1
    %s230 = scalar_select %p227, %s228, %s229
    %p233 = pneg %p227
    %p234 = scmp.eq.s32.totalorder %s20, 1
    %p235 = por %p233, %p234
    %p236 = scmp.ne.s32.totalorder %s228, %s231
    %p237 = scmp.eq.s32.totalorder %s20, 0
    %p238 = por %p236, %p237
    %p239 = scmp.ne.s32.totalorder %s228, %s231
    %p240 = scmp.eq.s32.totalorder %s25, 1
    %p241 = por %p239, %p240
    %p242 = scmp.ne.s32.totalorder %s231, %s232
    %p243 = scmp.eq.s32.totalorder %s25, 0
    %p244 = por %p242, %p243
    %p245 = scmp.ne.s32.totalorder %s231, %s232
    %p246 = scmp.eq.s32.totalorder %s26, 1
    %p247 = por %p245, %p246
    %p249 = scmp.ne.s32.totalorder %s232, %s248
    %p250 = scmp.eq.s32.totalorder %s26, 0
    %p251 = por %p249, %p250
    %s252 = ssub.s32 %s20, %s27
    %p253 = scmp.eq.s32.totalorder %s252, 0
    %s255 = sadd.s32 %s254, 1
    %s256 = scalar_select %p253, %s254, %s255
    %p259 = pneg %p253
    %p260 = scmp.eq.s32.totalorder %s20, 1
    %p261 = por %p259, %p260
    %p262 = scmp.ne.s32.totalorder %s254, %s257
    %p263 = scmp.eq.s32.totalorder %s20, 0
    %p264 = por %p262, %p263
    %p265 = scmp.ne.s32.totalorder %s254, %s257
    %p266 = scmp.eq.s32.totalorder %s25, 1
    %p267 = por %p265, %p266
    %p268 = scmp.ne.s32.totalorder %s257, %s258
    %p269 = scmp.eq.s32.totalorder %s25, 0
    %p270 = por %p268, %p269
    %p271 = scmp.ne.s32.totalorder %s257, %s258
    %p272 = scmp.eq.s32.totalorder %s26, 1
    %p273 = por %p271, %p272
    %p275 = scmp.ne.s32.totalorder %s258, %s274
    %p276 = scmp.eq.s32.totalorder %s26, 0
    %p277 = por %p275, %p276
    %s278 = ssub.s32 %s20, %s27
    %p279 = scmp.eq.s32.totalorder %s278, 0
    %s281 = sadd.s32 %s280, 1
    %s282 = scalar_select %p279, %s280, %s281
    %p285 = pneg %p279
    %p286 = scmp.eq.s32.totalorder %s20, 1
    %p287 = por %p285, %p286
    %p288 = scmp.ne.s32.totalorder %s280, %s283
    %p289 = scmp.eq.s32.totalorder %s20, 0
    %p290 = por %p288, %p289
    %p291 = scmp.ne.s32.totalorder %s280, %s283
    %p292 = scmp.eq.s32.totalorder %s25, 1
    %p293 = por %p291, %p292
    %p294 = scmp.ne.s32.totalorder %s283, %s284
    %p295 = scmp.eq.s32.totalorder %s25, 0
    %p296 = por %p294, %p295
    %p297 = scmp.ne.s32.totalorder %s283, %s284
    %p298 = scmp.eq.s32.totalorder %s26, 1
    %p299 = por %p297, %p298
    %p301 = scmp.ne.s32.totalorder %s284, %s300
    %p302 = scmp.eq.s32.totalorder %s26, 0
    %p303 = por %p301, %p302
    %s305 = sadd.s32 %s304, 1
    %p308 = scmp.eq.s32.totalorder %s20, 1
    %p309 = scmp.ne.s32.totalorder %s304, %s306
    %p310 = scmp.eq.s32.totalorder %s20, 0
    %p311 = por %p309, %p310
    %p312 = scmp.ne.s32.totalorder %s304, %s306
    %p313 = scmp.eq.s32.totalorder %s25, 1
    %p314 = por %p312, %p313
    %p315 = scmp.ne.s32.totalorder %s306, %s307
    %p316 = scmp.eq.s32.totalorder %s25, 0
    %p317 = por %p315, %p316
    %p318 = scmp.ne.s32.totalorder %s306, %s307
    %p319 = scmp.eq.s32.totalorder %s26, 1
    %p320 = por %p318, %p319
    %p322 = scmp.ne.s32.totalorder %s307, %s321
    %p323 = scmp.eq.s32.totalorder %s26, 0
    %p324 = por %p322, %p323
    %s326 = sadd.s32 %s325, 1
    %p329 = scmp.eq.s32.totalorder %s20, 1
    %p330 = scmp.ne.s32.totalorder %s325, %s327
    %p331 = scmp.eq.s32.totalorder %s20, 0
    %p332 = por %p330, %p331
    %p333 = scmp.ne.s32.totalorder %s325, %s327
    %p334 = scmp.eq.s32.totalorder %s25, 1
    %p335 = por %p333, %p334
    %p336 = scmp.ne.s32.totalorder %s327, %s328
    %p337 = scmp.eq.s32.totalorder %s25, 0
    %p338 = por %p336, %p337
    %p339 = scmp.ne.s32.totalorder %s327, %s328
    %p340 = scmp.eq.s32.totalorder %s26, 1
    %p341 = por %p339, %p340
    %p343 = scmp.ne.s32.totalorder %s328, %s342
    %p344 = scmp.eq.s32.totalorder %s26, 0
    %p345 = por %p343, %p344
    %s347 = sadd.s32 %s346, 1
    %p350 = scmp.eq.s32.totalorder %s20, 1
    %p351 = scmp.ne.s32.totalorder %s346, %s348
    %p352 = scmp.eq.s32.totalorder %s20, 0
    %p353 = por %p351, %p352
    %p354 = scmp.ne.s32.totalorder %s346, %s348
    %p355 = scmp.eq.s32.totalorder %s25, 1
    %p356 = por %p354, %p355
    %p357 = scmp.ne.s32.totalorder %s348, %s349
    %p358 = scmp.eq.s32.totalorder %s25, 0
    %p359 = por %p357, %p358
    %p360 = scmp.ne.s32.totalorder %s348, %s349
    %p361 = scmp.eq.s32.totalorder %s26, 1
    %p362 = por %p360, %p361
    %p364 = scmp.ne.s32.totalorder %s349, %s363
    %p365 = scmp.eq.s32.totalorder %s26, 0
    %p366 = por %p364, %p365
    %p367 = scmp.le.s32.totalorder 1, %s20
    %p368 = scmp.lt.s32.totalorder %s20, 3
    %p369 = pnand %p367, %p368
    %p370 = pneg %p369
    // Predicated region
    $region9: #{flow_model_forward.1} parent=5 // pred_check
      _
    $region10: #{flow_model_forward.1} parent=5 // pred_check_branch
      %372 = sbr.rel (%p369) target = $region12
    $region11: #{flow_model_forward.1} parent=5 // pred_region
      %s373 = ssub.s32 %s20, 1
      // Predicated region
      $region13: #{flow_model_forward.1} parent=11 // pred_check
        %p374 = pneg %p41
      $region14: #{flow_model_forward.1} parent=11 // pred_check_branch
        %376 = sbr.rel (%p374) target = $region16
      $region15: #{flow_model_forward.1} parent=11 // pred_region
        _
      $region16: #{flow_model_forward.1} parent=11 // pred_fallthru
        _
      // Predicated region
      $region17: #{flow_model_forward.1} parent=11 // pred_check
        %p377 = pneg %p62
      $region18: #{flow_model_forward.1} parent=11 // pred_check_branch
        %379 = sbr.rel (%p377) target = $region20
      $region19: #{flow_model_forward.1} parent=11 // pred_region
        _
      $region20: #{flow_model_forward.1} parent=11 // pred_fallthru
        _
    $region12: #{flow_model_forward.1} parent=5 // pred_fallthru
      _
    %p380 = scmp.lt.s32.totalorder %s20, 2
    // Predicated region
    $region21: #{flow_model_forward.1} parent=5 // pred_check
      %p381 = pneg %p380
    $region22: #{flow_model_forward.1} parent=5 // pred_check_branch
      %383 = sbr.rel (%p381) target = $region24
    $region23: #{flow_model_forward.1} parent=5 // pred_region
      // Predicated region
      $region25: #{flow_model_forward.1} parent=23 // pred_check
        %p384 = pneg %p82
      $region26: #{flow_model_forward.1} parent=23 // pred_check_branch
        %386 = sbr.rel (%p384) target = $region28
      $region27: #{flow_model_forward.1} parent=23 // pred_region
        %p387 = scmp.lt.s32.totalorder %s20, 1
        %s388 = scalar_select %p387, %s20, 1
        %s389 = smul.addr %s388, 2
        %s390 = smul.addr %s389, 8
        %s391 = scalar_lea.vmem %s2, %s390
      $region28: #{flow_model_forward.1} parent=23 // pred_fallthru
        _
      // Predicated region
      $region29: #{flow_model_forward.1} parent=23 // pred_check
        %p392 = pneg %p108
      $region30: #{flow_model_forward.1} parent=23 // pred_check_branch
        %394 = sbr.rel (%p392) target = $region32
      $region31: #{flow_model_forward.1} parent=23 // pred_region
        %p395 = scmp.lt.s32.totalorder %s20, 1
        %s396 = scalar_select %p395, %s20, 1
        %s397 = smul.addr %s396, 2
        %s398 = smul.addr %s397, 8
        %s399 = scalar_lea.vmem %s3, %s398
      $region32: #{flow_model_forward.1} parent=23 // pred_fallthru
        _
      // Predicated region
      $region33: #{flow_model_forward.1} parent=23 // pred_check
        %p400 = pneg %p134
      $region34: #{flow_model_forward.1} parent=23 // pred_check_branch
        %402 = sbr.rel (%p400) target = $region36
      $region35: #{flow_model_forward.1} parent=23 // pred_region
        %p403 = scmp.lt.s32.totalorder %s20, 1
        %s404 = scalar_select %p403, %s20, 1
        %s405 = smul.addr %s404, 2
        %s406 = smul.addr %s405, 8
        %s407 = scalar_lea.vmem %s4, %s406
      $region36: #{flow_model_forward.1} parent=23 // pred_fallthru
        _
      // Predicated region
      $region37: #{flow_model_forward.1} parent=23 // pred_check
        %p408 = pneg %p160
      $region38: #{flow_model_forward.1} parent=23 // pred_check_branch
        %410 = sbr.rel (%p408) target = $region40
      $region39: #{flow_model_forward.1} parent=23 // pred_region
        %p411 = scmp.lt.s32.totalorder %s20, 1
        %s412 = scalar_select %p411, %s20, 1
        %s413 = smul.addr %s412, 4
        %s414 = smul.addr %s413, 4
        %s415 = scalar_lea.vmem %s5, %s414
      $region40: #{flow_model_forward.1} parent=23 // pred_fallthru
        _
      // Predicated region
      $region41: #{flow_model_forward.1} parent=23 // pred_check
        %p416 = pneg %p186
      $region42: #{flow_model_forward.1} parent=23 // pred_check_branch
        %418 = sbr.rel (%p416) target = $region44
      $region43: #{flow_model_forward.1} parent=23 // pred_region
        %p419 = scmp.lt.s32.totalorder %s20, 1
        %s420 = scalar_select %p419, %s20, 1
        %s421 = smul.addr %s420, 4
        %s422 = smul.addr %s421, 8
        %s423 = scalar_lea.vmem %s6, %s422
      $region44: #{flow_model_forward.1} parent=23 // pred_fallthru
        _
      // Predicated region
      $region45: #{flow_model_forward.1} parent=23 // pred_check
        %p424 = pneg %p212
      $region46: #{flow_model_forward.1} parent=23 // pred_check_branch
        %426 = sbr.rel (%p424) target = $region48
      $region47: #{flow_model_forward.1} parent=23 // pred_region
        %p427 = scmp.lt.s32.totalorder %s20, 1
        %s428 = scalar_select %p427, %s20, 1
        %s429 = smul.addr %s428, 4
        %s430 = smul.addr %s429, 4
        %s431 = scalar_lea.vmem %s7, %s430
      $region48: #{flow_model_forward.1} parent=23 // pred_fallthru
        _
      // Predicated region
      $region49: #{flow_model_forward.1} parent=23 // pred_check
        %p432 = pneg %p238
      $region50: #{flow_model_forward.1} parent=23 // pred_check_branch
        %434 = sbr.rel (%p432) target = $region52
      $region51: #{flow_model_forward.1} parent=23 // pred_region
        %p435 = scmp.lt.s32.totalorder %s20, 1
        %s436 = scalar_select %p435, %s20, 1
        %s437 = smul.addr %s436, 4
        %s438 = smul.addr %s437, 8
        %s439 = scalar_lea.vmem %s8, %s438
      $region52: #{flow_model_forward.1} parent=23 // pred_fallthru
        _
      // Predicated region
      $region53: #{flow_model_forward.1} parent=23 // pred_check
        %p440 = pneg %p264
      $region54: #{flow_model_forward.1} parent=23 // pred_check_branch
        %442 = sbr.rel (%p440) target = $region56
      $region55: #{flow_model_forward.1} parent=23 // pred_region
        %p443 = scmp.lt.s32.totalorder %s20, 1
        %s444 = scalar_select %p443, %s20, 1
        %s445 = smul.addr %s444, 6
        %s446 = smul.addr %s445, 4
        %s447 = scalar_lea.vmem %s9, %s446
      $region56: #{flow_model_forward.1} parent=23 // pred_fallthru
        _
      // Predicated region
      $region57: #{flow_model_forward.1} parent=23 // pred_check
        %p448 = pneg %p290
      $region58: #{flow_model_forward.1} parent=23 // pred_check_branch
        %450 = sbr.rel (%p448) target = $region60
      $region59: #{flow_model_forward.1} parent=23 // pred_region
        %p451 = scmp.lt.s32.totalorder %s20, 1
        %s452 = scalar_select %p451, %s20, 1
        %s453 = smul.addr %s452, 2
        %s454 = smul.addr %s453, 8
        %s455 = scalar_lea.vmem %s10, %s454
      $region60: #{flow_model_forward.1} parent=23 // pred_fallthru
        _
    $region24: #{flow_model_forward.1} parent=5 // pred_fallthru
      _
    %p456 = scmp.le.s32.totalorder 1, %s20
    %p457 = scmp.lt.s32.totalorder %s20, 3
    %p458 = pnand %p456, %p457
    %p459 = pneg %p458
    // Predicated region
    $region61: #{flow_model_forward.1} parent=5 // pred_check
      _
    $region62: #{flow_model_forward.1} parent=5 // pred_check_branch
      %461 = sbr.rel (%p458) target = $region64
    $region63: #{flow_model_forward.1} parent=5 // pred_region
      %s462 = ssub.s32 %s20, 1
      %p463 = pneg %p41
      %p464 = pneg %p38
      %p465 = pneg %p62
      %p466 = pneg %p59
      %p467 = scmp.lt.s32.totalorder %s25, 1
      %s468 = scalar_select %p467, %s25, 1
      %s469 = smul.addr %s468, 2
      %s470 = smul.addr %s469, 8
      %s471 = scalar_lea.vmem %s2, %s470
      %p472 = pneg %p88
      %p473 = pneg %p85
      %p474 = scmp.lt.s32.totalorder %s25, 1
      %s475 = scalar_select %p474, %s25, 1
      %s476 = smul.addr %s475, 2
      %s477 = smul.addr %s476, 8
      %s478 = scalar_lea.vmem %s3, %s477
      %p479 = pneg %p114
      %p480 = pneg %p111
      %p481 = scmp.lt.s32.totalorder %s25, 1
      %s482 = scalar_select %p481, %s25, 1
      %s483 = smul.addr %s482, 2
      %s484 = smul.addr %s483, 8
      %s485 = scalar_lea.vmem %s4, %s484
      %p486 = pneg %p140
      %p487 = pneg %p137
      %p488 = scmp.lt.s32.totalorder %s25, 1
      %s489 = scalar_select %p488, %s25, 1
      %s490 = smul.addr %s489, 4
      %s491 = smul.addr %s490, 4
      %s492 = scalar_lea.vmem %s5, %s491
      %p493 = pneg %p166
      %p494 = pneg %p163
      %p495 = scmp.lt.s32.totalorder %s25, 1
      %s496 = scalar_select %p495, %s25, 1
      %s497 = smul.addr %s496, 4
      %s498 = smul.addr %s497, 8
      %s499 = scalar_lea.vmem %s6, %s498
      %p500 = pneg %p192
      %p501 = pneg %p189
      %p502 = scmp.lt.s32.totalorder %s25, 1
      %s503 = scalar_select %p502, %s25, 1
      %s504 = smul.addr %s503, 4
      %s505 = smul.addr %s504, 4
      %s506 = scalar_lea.vmem %s7, %s505
      %p507 = pneg %p218
      %p508 = pneg %p215
      %p509 = scmp.lt.s32.totalorder %s25, 1
      %s510 = scalar_select %p509, %s25, 1
      %s511 = smul.addr %s510, 4
      %s512 = smul.addr %s511, 8
      %s513 = scalar_lea.vmem %s8, %s512
      %p514 = pneg %p244
      %p515 = pneg %p241
      %p516 = scmp.lt.s32.totalorder %s25, 1
      %s517 = scalar_select %p516, %s25, 1
      %s518 = smul.addr %s517, 6
      %s519 = smul.addr %s518, 4
      %s520 = scalar_lea.vmem %s9, %s519
      %p521 = pneg %p270
      %p522 = pneg %p267
      %p523 = scmp.lt.s32.totalorder %s25, 1
      %s524 = scalar_select %p523, %s25, 1
      %s525 = smul.addr %s524, 2
      %s526 = smul.addr %s525, 8
      %s527 = scalar_lea.vmem %s10, %s526
      %p528 = pneg %p296
      %p529 = pneg %p293
      %p530 = pneg %p317
      %p531 = pneg %p314
      %p532 = pneg %p338
      %p533 = pneg %p335
      %p534 = pneg %p359
      %p535 = pneg %p356
      %p536 = scmp.lt.s32.totalorder %s25, 1
      %s537 = scalar_select %p536, %s25, 1
      %s538 = smul.addr %s537, 2
      %s539 = smul.addr %s538, 8
      %s540 = scalar_lea.vmem %s2, %s539
      %p541 = scmp.lt.s32.totalorder %s25, 1
      %s542 = scalar_select %p541, %s25, 1
      %s543 = smul.addr %s542, 2
      %s544 = smul.addr %s543, 8
      %s545 = scalar_lea.vmem %s3, %s544
      %p546 = scmp.lt.s32.totalorder %s25, 1
      %s547 = scalar_select %p546, %s25, 1
      %s548 = smul.addr %s547, 2
      %s549 = smul.addr %s548, 8
      %s550 = scalar_lea.vmem %s4, %s549
      %p551 = scmp.lt.s32.totalorder %s25, 1
      %s552 = scalar_select %p551, %s25, 1
      %s553 = smul.addr %s552, 4
      %s554 = smul.addr %s553, 4
      %s555 = scalar_lea.vmem %s5, %s554
      %p556 = scmp.lt.s32.totalorder %s25, 1
      %s557 = scalar_select %p556, %s25, 1
      %s558 = smul.addr %s557, 4
      %s559 = smul.addr %s558, 8
      %s560 = scalar_lea.vmem %s6, %s559
      %p561 = scmp.lt.s32.totalorder %s25, 1
      %s562 = scalar_select %p561, %s25, 1
      %s563 = smul.addr %s562, 4
      %s564 = smul.addr %s563, 4
      %s565 = scalar_lea.vmem %s7, %s564
      %p566 = scmp.lt.s32.totalorder %s25, 1
      %s567 = scalar_select %p566, %s25, 1
      %s568 = smul.addr %s567, 4
      %s569 = smul.addr %s568, 8
      %s570 = scalar_lea.vmem %s8, %s569
      %p571 = scmp.lt.s32.totalorder %s25, 1
      %s572 = scalar_select %p571, %s25, 1
      %s573 = smul.addr %s572, 6
      %s574 = smul.addr %s573, 4
      %s575 = scalar_lea.vmem %s9, %s574
      %p576 = scmp.lt.s32.totalorder %s25, 1
      %s577 = scalar_select %p576, %s25, 1
      %s578 = smul.addr %s577, 2
      %s579 = smul.addr %s578, 8
      %s580 = scalar_lea.vmem %s10, %s579
      %p582 = scmp.eq.s32.totalorder %s25, 0
      // Predicated region
      $region65: #{flow_model_forward.1} parent=63 // pred_check
        %p583 = pneg %p582
      $region66: #{flow_model_forward.1} parent=63 // pred_check_branch
        %585 = sbr.rel (%p583) target = $region68
      $region67: #{flow_model_forward.1} parent=63 // pred_region
        %v586 = vld [vmem:[%s1] sm:$0xff]
        %v587 = vld [vmem:[%s1 + $0x8] sm:$0xff]
        %588 = vst [vmem:[#allocation2] sm:$0xff] %v586
        %589 = vst [vmem:[#allocation2 + $0x8] sm:$0xff] %v587
        %590 = vst [vmem:[#allocation3] sm:$0xff] 0.0
      $region68: #{flow_model_forward.1} parent=63 // pred_fallthru
        _
      %v591 = vld [vmem:[#allocation2] sm:$0xff]
      %v592 = vld [vmem:[#allocation2 + $0x8] sm:$0xff]
      %v593 = vld [vmem:[%s540] sm:$0xff]
      %v594 = vld [vmem:[%s540 + $0x8] sm:$0xff]
      %596 = vset.pattern.permute.xlu0 0
      %597 = vperm.xlu0 %596, %v593
      %v598 = vpop.permute.xlu0 %597
      %601 = vset.pattern.permute.xlu0 0
      %602 = vperm.xlu0 %601, %v594
      %v603 = vpop.permute.xlu0 %602
      %v605 = vadd.f32 %v591, %v598
      %v606 = vadd.f32 %v592, %v603
      %v607 = vld [vmem:[%s545] sm:$0xff]
      %v608 = vld [vmem:[%s545 + $0x8] sm:$0xff]
      %610 = vset.pattern.permute.xlu0 0
      %611 = vperm.xlu0 %610, %v607
      %v612 = vpop.permute.xlu0 %611
      %615 = vset.pattern.permute.xlu0 0
      %616 = vperm.xlu0 %615, %v608
      %v617 = vpop.permute.xlu0 %616
      %v619 = vmul.f32 %v605, %v612
      %v620 = vmul.f32 %v606, %v617
      %v621 = vld [vmem:[%s550] sm:$0xff]
      %v622 = vld [vmem:[%s550 + $0x8] sm:$0xff]
      %vm623 = vcmask 130048
      %v625 = vsel %vm623, %v621, 0
      %v628 = vsel %vm623, %v622, 0
      %630 = vmatpush.msra.mxu0 0.0
      %631 = vmatpush.msra.mxu0 0.0
      %632 = vmatpush.msra.mxu0 0.0
      %633 = vmatpush.msra.mxu0 0.0
      %634 = vmatpush.msra.mxu0 0.0
      %635 = vmatpush.msra.mxu0 0.0
      %636 = vmatpush.msra.mxu0 0.0
      %637 = vmatpush.msra.mxu0 0.0
      %638 = vmatpush.msra.mxu0 0.0
      %639 = vmatpush.msra.mxu0 0.0
      %640 = vmatpush.msra.mxu0 0.0
      %641 = vmatpush.msra.mxu0 0.0
      %642 = vmatpush.msra.mxu0 0.0
      %643 = vmatpush.msra.mxu0 0.0
      %644 = vmatpush.msra.mxu0 %v620
      %645 = vmatpush.msra.mxu0 %v619
      %646 = vmatmul.f32.gmra.mxu0 %v625
      %v647 = vpop.f32.mrf.mxu0
      %v648 = vadd.f32 0.0, %v647
      %649 = vmatmul.f32.gmra.mxu0 %v628
      %v650 = vpop.f32.mrf.mxu0
      %v651 = vadd.f32 0.0, %v650
      %652 = vdwg.mxu0
      %653 = vrot.lane.b32.xlu0 %v648, 9
      %v654 = vpop.permute.xlu0 %653
      %v655 = vld [vmem:[%s0] sm:$0x1]
      %v656 = vperm.slane %v655, 0
      %v657 = vmul.f32 %v654, %v656
      %658 = vrot.lane.b32.xlu0 %v648, 8
      %v659 = vpop.permute.xlu0 %658
      %v660 = vld [vmem:[%s0 + $0x1] sm:$0x1]
      %v661 = vperm.slane %v660, 0
      %v662 = vmul.f32 %v659, %v661
      %663 = vrot.lane.b32.xlu0 %v648, 7
      %v664 = vpop.permute.xlu0 %663
      %v665 = vld [vmem:[%s0 + $0x2] sm:$0x1]
      %v666 = vperm.slane %v665, 0
      %v667 = vmul.f32 %v664, %v666
      %668 = vrot.lane.b32.xlu0 %v648, 1
      %v669 = vpop.permute.xlu0 %668
      %v670 = vld [vmem:[%s0 + $0x3] sm:$0x1]
      %v671 = vperm.slane %v670, 0
      %v672 = vmul.f32 %v669, %v671
      %673 = vrot.lane.b32.xlu0 %v648, 127
      %v674 = vpop.permute.xlu0 %673
      %v675 = vld [vmem:[%s0 + $0x5] sm:$0x1]
      %v676 = vperm.slane %v675, 0
      %v677 = vmul.f32 %v674, %v676
      %678 = vrot.lane.b32.xlu0 %v648, 121
      %v679 = vpop.permute.xlu0 %678
      %v680 = vld [vmem:[%s0 + $0x6] sm:$0x1]
      %v681 = vperm.slane %v680, 0
      %v682 = vmul.f32 %v679, %v681
      %683 = vrot.lane.b32.xlu0 %v648, 120
      %v684 = vpop.permute.xlu0 %683
      %v685 = vld [vmem:[%s0 + $0x7] sm:$0x1]
      %v686 = vperm.slane %v685, 0
      %v687 = vmul.f32 %v684, %v686
      %688 = vrot.lane.b32.xlu0 %v648, 119
      %v689 = vpop.permute.xlu0 %688
      %v690 = vld [vmem:[%s0 + $0x8] sm:$0x1]
      %v691 = vperm.slane %v690, 0
      %v692 = vmul.f32 %v689, %v691
      %v693 = vld [vmem:[%s555] sm:$0xf]
      %v694 = vld [vmem:[%s555 + $0x4] sm:$0xf]
      %v695 = vld [vmem:[%s555 + $0x8] sm:$0xf]
      %v696 = vld [vmem:[%s555 + $0xc] sm:$0xf]
      %v697 = vpack.c.bf16 %v662, %v657
      %v698 = vpack.c.bf16 %v672, %v667
      %v699 = vpack.c.bf16 %v677, %v648
      %v700 = vpack.c.bf16 %v687, %v682
      %v701 = vpack.c.bf16 %v692, %v692
      %v702 = vld [vmem:[%s560] sm:$0xff]
      %v703 = vld [vmem:[%s560 + $0x8] sm:$0xff]
      %v704 = vld [vmem:[%s560 + $0x10] sm:$0xff]
      %v705 = vld [vmem:[%s560 + $0x18] sm:$0xff]
      %707 = vset.pattern.permute.xlu0 0
      %708 = vperm.xlu0 %707, %v702
      %v709 = vpop.permute.xlu0 %708
      %712 = vset.pattern.permute.xlu0 0
      %713 = vperm.xlu0 %712, %v703
      %v714 = vpop.permute.xlu0 %713
      %717 = vset.pattern.permute.xlu0 0
      %718 = vperm.xlu0 %717, %v704
      %v719 = vpop.permute.xlu0 %718
      %722 = vset.pattern.permute.xlu0 0
      %723 = vperm.xlu0 %722, %v705
      %v724 = vpop.permute.xlu0 %723
      %v730 = vunpack.c.l.b16 %v693
      %v731 = vunpack.c.l.b16 %v694
      %v732 = vunpack.c.l.b16 %v695
      %v733 = vunpack.c.l.b16 %v696
      %v734 = vpack.c.b16 %v731, %v730
      %v735 = vpack.c.b16 %v733, %v732
      %vm736 = vcmask 588800
      %v738 = vsel %vm736, %v734, 0
      %v741 = vsel %vm736, %v735, 0
      %vm743 = vcmask 1043456
      %v745 = vsel %vm743, %v701, 0
      %747 = vmatpush.bf16.msra.mxu0 0
      %748 = vmatpush.bf16.msra.mxu0 0
      %749 = vmatpush.bf16.msra.mxu0 0
      %750 = vmatpush.bf16.msra.mxu0 %v745
      %751 = vmatpush.bf16.msra.mxu0 %v700
      %752 = vmatpush.bf16.msra.mxu0 %v699
      %753 = vmatpush.bf16.msra.mxu0 %v698
      %754 = vmatpush.bf16.msra.mxu0 %v697
      %755 = vmatmul.bf16.gmra.mxu0 %v738
      %v756 = vpop.f32.mrf.mxu0
      %v757 = vadd.f32 %v709, %v756
      %v758 = vpop.f32.mrf.mxu0
      %v759 = vadd.f32 %v714, %v758
      %760 = vmatmul.bf16.gmra.mxu0 %v741
      %v761 = vpop.f32.mrf.mxu0
      %v762 = vadd.f32 %v719, %v761
      %v763 = vpop.f32.mrf.mxu0
      %v764 = vadd.f32 %v724, %v763
      %765 = vdwg.mxu0
      %v766 = vmax.f32 %v757, 0.0
      %v767 = vmax.f32 %v759, 0.0
      %v768 = vmax.f32 %v762, 0.0
      %v769 = vmax.f32 %v764, 0.0
      %v770 = vld [vmem:[%s565] sm:$0xf]
      %v771 = vld [vmem:[%s565 + $0x4] sm:$0xf]
      %v772 = vld [vmem:[%s565 + $0x8] sm:$0xf]
      %v773 = vld [vmem:[%s565 + $0xc] sm:$0xf]
      %v774 = vpack.c.bf16 %v767, %v766
      %v775 = vpack.c.bf16 %v769, %v768
      %v776 = vld [vmem:[%s570] sm:$0xff]
      %v777 = vld [vmem:[%s570 + $0x8] sm:$0xff]
      %v778 = vld [vmem:[%s570 + $0x10] sm:$0xff]
      %v779 = vld [vmem:[%s570 + $0x18] sm:$0xff]
      %781 = vset.pattern.permute.xlu0 0
      %782 = vperm.xlu0 %781, %v776
      %v783 = vpop.permute.xlu0 %782
      %786 = vset.pattern.permute.xlu0 0
      %787 = vperm.xlu0 %786, %v777
      %v788 = vpop.permute.xlu0 %787
      %791 = vset.pattern.permute.xlu0 0
      %792 = vperm.xlu0 %791, %v778
      %v793 = vpop.permute.xlu0 %792
      %796 = vset.pattern.permute.xlu0 0
      %797 = vperm.xlu0 %796, %v779
      %v798 = vpop.permute.xlu0 %797
      %v804 = vunpack.c.l.b16 %v770
      %v805 = vunpack.c.l.b16 %v771
      %v806 = vunpack.c.l.b16 %v772
      %v807 = vunpack.c.l.b16 %v773
      %v808 = vpack.c.b16 %v805, %v804
      %v809 = vpack.c.b16 %v807, %v806
      %vm810 = vcmask 261120
      %v812 = vsel %vm810, %v808, 0
      %v815 = vsel %vm810, %v809, 0
      %817 = vmatpush.bf16.msra.mxu0 0
      %818 = vmatpush.bf16.msra.mxu0 0
      %819 = vmatpush.bf16.msra.mxu0 0
      %820 = vmatpush.bf16.msra.mxu0 0
      %821 = vmatpush.bf16.msra.mxu0 0
      %822 = vmatpush.bf16.msra.mxu0 0
      %823 = vmatpush.bf16.msra.mxu0 %v775
      %824 = vmatpush.bf16.msra.mxu0 %v774
      %825 = vmatmul.bf16.gmra.mxu0 %v812
      %v826 = vpop.f32.mrf.mxu0
      %v827 = vadd.f32 %v783, %v826
      %v828 = vpop.f32.mrf.mxu0
      %v829 = vadd.f32 %v788, %v828
      %830 = vmatmul.bf16.gmra.mxu0 %v815
      %v831 = vpop.f32.mrf.mxu0
      %v832 = vadd.f32 %v793, %v831
      %v833 = vpop.f32.mrf.mxu0
      %v834 = vadd.f32 %v798, %v833
      %835 = vdwg.mxu0
      %v836 = vmax.f32 %v827, 0.0
      %v837 = vmax.f32 %v829, 0.0
      %v838 = vmax.f32 %v832, 0.0
      %v839 = vmax.f32 %v834, 0.0
      %840 = vrot.lane.b32.xlu0 %v836, 9
      %v841 = vpop.permute.xlu0 %840
      %842 = vrot.lane.b32.xlu0 %v837, 9
      %v843 = vpop.permute.xlu0 %842
      %844 = vrot.lane.b32.xlu0 %v838, 9
      %v845 = vpop.permute.xlu0 %844
      %846 = vrot.lane.b32.xlu0 %v839, 9
      %v847 = vpop.permute.xlu0 %846
      %v848 = vmul.f32 %v841, %v656
      %v849 = vmul.f32 %v843, %v656
      %v850 = vmul.f32 %v845, %v656
      %v851 = vmul.f32 %v847, %v656
      %852 = vrot.lane.b32.xlu0 %v836, 8
      %v853 = vpop.permute.xlu0 %852
      %854 = vrot.lane.b32.xlu0 %v837, 8
      %v855 = vpop.permute.xlu0 %854
      %856 = vrot.lane.b32.xlu0 %v838, 8
      %v857 = vpop.permute.xlu0 %856
      %858 = vrot.lane.b32.xlu0 %v839, 8
      %v859 = vpop.permute.xlu0 %858
      %v860 = vmul.f32 %v853, %v661
      %v861 = vmul.f32 %v855, %v661
      %v862 = vmul.f32 %v857, %v661
      %v863 = vmul.f32 %v859, %v661
      %864 = vrot.lane.b32.xlu0 %v836, 7
      %v865 = vpop.permute.xlu0 %864
      %866 = vrot.lane.b32.xlu0 %v837, 7
      %v867 = vpop.permute.xlu0 %866
      %868 = vrot.lane.b32.xlu0 %v838, 7
      %v869 = vpop.permute.xlu0 %868
      %870 = vrot.lane.b32.xlu0 %v839, 7
      %v871 = vpop.permute.xlu0 %870
      %v872 = vmul.f32 %v865, %v666
      %v873 = vmul.f32 %v867, %v666
      %v874 = vmul.f32 %v869, %v666
      %v875 = vmul.f32 %v871, %v666
      %876 = vrot.lane.b32.xlu0 %v836, 1
      %v877 = vpop.permute.xlu0 %876
      %878 = vrot.lane.b32.xlu0 %v837, 1
      %v879 = vpop.permute.xlu0 %878
      %880 = vrot.lane.b32.xlu0 %v838, 1
      %v881 = vpop.permute.xlu0 %880
      %882 = vrot.lane.b32.xlu0 %v839, 1
      %v883 = vpop.permute.xlu0 %882
      %v884 = vmul.f32 %v877, %v671
      %v885 = vmul.f32 %v879, %v671
      %v886 = vmul.f32 %v881, %v671
      %v887 = vmul.f32 %v883, %v671
      %888 = vrot.lane.b32.xlu0 %v836, 127
      %v889 = vpop.permute.xlu0 %888
      %890 = vrot.lane.b32.xlu0 %v837, 127
      %v891 = vpop.permute.xlu0 %890
      %892 = vrot.lane.b32.xlu0 %v838, 127
      %v893 = vpop.permute.xlu0 %892
      %894 = vrot.lane.b32.xlu0 %v839, 127
      %v895 = vpop.permute.xlu0 %894
      %v896 = vmul.f32 %v889, %v676
      %v897 = vmul.f32 %v891, %v676
      %v898 = vmul.f32 %v893, %v676
      %v899 = vmul.f32 %v895, %v676
      %900 = vrot.lane.b32.xlu0 %v836, 121
      %v901 = vpop.permute.xlu0 %900
      %902 = vrot.lane.b32.xlu0 %v837, 121
      %v903 = vpop.permute.xlu0 %902
      %904 = vrot.lane.b32.xlu0 %v838, 121
      %v905 = vpop.permute.xlu0 %904
      %906 = vrot.lane.b32.xlu0 %v839, 121
      %v907 = vpop.permute.xlu0 %906
      %v908 = vmul.f32 %v901, %v681
      %v909 = vmul.f32 %v903, %v681
      %v910 = vmul.f32 %v905, %v681
      %v911 = vmul.f32 %v907, %v681
      %912 = vrot.lane.b32.xlu0 %v836, 120
      %v913 = vpop.permute.xlu0 %912
      %914 = vrot.lane.b32.xlu0 %v837, 120
      %v915 = vpop.permute.xlu0 %914
      %916 = vrot.lane.b32.xlu0 %v838, 120
      %v917 = vpop.permute.xlu0 %916
      %918 = vrot.lane.b32.xlu0 %v839, 120
      %v919 = vpop.permute.xlu0 %918
      %v920 = vmul.f32 %v913, %v686
      %v921 = vmul.f32 %v915, %v686
      %v922 = vmul.f32 %v917, %v686
      %v923 = vmul.f32 %v919, %v686
      %924 = vrot.lane.b32.xlu0 %v836, 119
      %v925 = vpop.permute.xlu0 %924
      %926 = vrot.lane.b32.xlu0 %v837, 119
      %v927 = vpop.permute.xlu0 %926
      %928 = vrot.lane.b32.xlu0 %v838, 119
      %v929 = vpop.permute.xlu0 %928
      %930 = vrot.lane.b32.xlu0 %v839, 119
      %v931 = vpop.permute.xlu0 %930
      %v932 = vmul.f32 %v925, %v691
      %v933 = vmul.f32 %v927, %v691
      %v934 = vmul.f32 %v929, %v691
      %v935 = vmul.f32 %v931, %v691
      %v936 = vld [vmem:[%s575] sm:$0xff]
      %v937 = vld [vmem:[%s575 + $0x8] sm:$0xf]
      %v938 = vld [vmem:[%s575 + $0xc] sm:$0xff]
      %v939 = vld [vmem:[%s575 + $0x14] sm:$0xf]
      %v940 = vpack.c.bf16 %v849, %v848
      %v941 = vpack.c.bf16 %v851, %v850
      %v942 = vpack.c.bf16 %v861, %v860
      %v943 = vpack.c.bf16 %v863, %v862
      %v944 = vpack.c.bf16 %v873, %v872
      %v945 = vpack.c.bf16 %v875, %v874
      %v946 = vpack.c.bf16 %v885, %v884
      %v947 = vpack.c.bf16 %v887, %v886
      %v948 = vpack.c.bf16 %v837, %v836
      %v949 = vpack.c.bf16 %v839, %v838
      %v950 = vpack.c.bf16 %v897, %v896
      %v951 = vpack.c.bf16 %v899, %v898
      %v952 = vpack.c.bf16 %v909, %v908
      %v953 = vpack.c.bf16 %v911, %v910
      %v954 = vpack.c.bf16 %v921, %v920
      %v955 = vpack.c.bf16 %v923, %v922
      %v956 = vpack.c.bf16 %v933, %v932
      %v957 = vpack.c.bf16 %v935, %v934
      %v958 = vld [vmem:[%s580] sm:$0xff]
      %v959 = vld [vmem:[%s580 + $0x8] sm:$0xff]
      %961 = vset.pattern.permute.xlu0 0
      %962 = vperm.xlu0 %961, %v958
      %v963 = vpop.permute.xlu0 %962
      %966 = vset.pattern.permute.xlu0 0
      %967 = vperm.xlu0 %966, %v959
      %v968 = vpop.permute.xlu0 %967
      %v974 = vunpack.c.l.b16 %v936
      %v975 = vunpack.c.h.b16 %v936
      %v976 = vunpack.c.l.b16 %v937
      %v977 = vunpack.c.l.b16 %v938
      %v978 = vunpack.c.h.b16 %v938
      %v979 = vunpack.c.l.b16 %v939
      %v980 = vpack.c.b16 %v977, %v974
      %v981 = vpack.c.b16 %v978, %v975
      %v982 = vpack.c.b16 %v979, %v976
      %v986 = vsel %vm810, %v982, 0
      %988 = vmatpush.bf16.msra.mxu0 %v947
      %989 = vmatpush.bf16.msra.mxu0 %v946
      %990 = vmatpush.bf16.msra.mxu0 %v945
      %991 = vmatpush.bf16.msra.mxu0 %v944
      %992 = vmatpush.bf16.msra.mxu0 %v943
      %993 = vmatpush.bf16.msra.mxu0 %v942
      %994 = vmatpush.bf16.msra.mxu0 %v941
      %995 = vmatpush.bf16.msra.mxu0 %v940
      %996 = vmatmul.bf16.gmra.mxu0 %v980
      %v997 = vpop.f32.mrf.mxu0
      %v998 = vadd.f32 %v963, %v997
      %v999 = vpop.f32.mrf.mxu0
      %v1000 = vadd.f32 %v968, %v999
      %1001 = vdwg.mxu0
      %1002 = vmatpush.bf16.msra.mxu0 %v955
      %1003 = vmatpush.bf16.msra.mxu0 %v954
      %1004 = vmatpush.bf16.msra.mxu0 %v953
      %1005 = vmatpush.bf16.msra.mxu0 %v952
      %1006 = vmatpush.bf16.msra.mxu0 %v951
      %1007 = vmatpush.bf16.msra.mxu0 %v950
      %1008 = vmatpush.bf16.msra.mxu0 %v949
      %1009 = vmatpush.bf16.msra.mxu0 %v948
      %1010 = vmatmul.bf16.gmra.mxu0 %v981
      %v1011 = vpop.f32.mrf.mxu0
      %v1012 = vadd.f32 %v998, %v1011
      %v1013 = vpop.f32.mrf.mxu0
      %v1014 = vadd.f32 %v1000, %v1013
      %1015 = vdwg.mxu0
      %1016 = vmatpush.bf16.msra.mxu0 0
      %1017 = vmatpush.bf16.msra.mxu0 0
      %1018 = vmatpush.bf16.msra.mxu0 0
      %1019 = vmatpush.bf16.msra.mxu0 0
      %1020 = vmatpush.bf16.msra.mxu0 0
      %1021 = vmatpush.bf16.msra.mxu0 0
      %1022 = vmatpush.bf16.msra.mxu0 %v957
      %1023 = vmatpush.bf16.msra.mxu0 %v956
      %1024 = vmatmul.bf16.gmra.mxu0 %v986
      %v1025 = vpop.f32.mrf.mxu0
      %v1026 = vadd.f32 %v1012, %v1025
      %v1027 = vpop.f32.mrf.mxu0
      %v1028 = vadd.f32 %v1014, %v1027
      %1029 = vdwg.mxu0
      %v1030 = vadd.f32 %v1028, 2.0
      %v1031 = vsub.f32 0.0, %v1030
      %v1032 = vmax.f32 %v1031, 0.0
      %v1033 = vsub.f32 %v1031, %v1032
      %v1034 = vmul.f32 %v1033, 1.442695
      %v1035 = vpow.pop %v1034
      %v1036 = vsub.f32 0.0, %v1032
      %v1037 = vmul.f32 %v1036, 1.442695
      %v1038 = vpow.pop %v1037
      %v1039 = vadd.f32 %v1038, %v1035
      %v1040 = vlog2.pop %v1039
      %v1041 = vmul.f32 %v1040, 0.6931472
      %v1042 = vadd.f32 %v1032, %v1041
      %v1043 = vsub.f32 0.0, %v1042
      %v1044 = vrcp.pop %v1039
      %v1045 = vmul.f32 %v1038, %v1044
      %v1046 = vadd.f32 %v651, %v1026
      %v1047 = vmul.f32 %v1046, %v1045
      %v1048 = vld [vmem:[#allocation3] sm:$0xff]
      %v1049 = vadd.f32 %v1048, %v1043
      %1050 = vst [vmem:[#allocation3] sm:$0xff] %v1049
      %1051 = vst [vmem:[#allocation2] sm:$0xff] %v648
      %1052 = vst [vmem:[#allocation2 + $0x8] sm:$0xff] %v1047
      %p1053 = scmp.eq.s32.totalorder %s25, 1
      // Predicated region
      $region69: #{flow_model_forward.1} parent=63 // pred_check
        %p1054 = pneg %p1053
      $region70: #{flow_model_forward.1} parent=63 // pred_check_branch
        %1056 = sbr.rel (%p1054) target = $region72
      $region71: #{flow_model_forward.1} parent=63 // pred_region
        %v1057 = vld [vmem:[#allocation2] sm:$0xff]
        %v1058 = vld [vmem:[#allocation2 + $0x8] sm:$0xff]
        %1059 = vst [vmem:[%s11] sm:$0xff] %v1057
        %1060 = vst [vmem:[%s11 + $0x8] sm:$0xff] %v1058
        %v1061 = vld [vmem:[#allocation3] sm:$0xff]
        %v1062 = vrot.slane %v1061, 4
        %v1063 = vadd.f32 %v1061, %v1062
        %v1064 = vrot.slane %v1063, 2
        %v1065 = vadd.f32 %v1063, %v1064
        %v1066 = vrot.slane %v1065, 1
        %v1067 = vadd.f32 %v1065, %v1066
        %1068 = vst [vmem:[%s12] sm:$0x1] %v1067
        %v1069 = vmul.f32 %v1057, -0.5
        %v1070 = vmul.f32 %v1058, -0.5
        %v1071 = vmul.f32 %v1069, %v1057
        %v1072 = vmul.f32 %v1070, %v1058
        %v1073 = vadd.f32 %v1071, %v1072
        %v1074 = vrot.slane %v1073, 4
        %v1075 = vadd.f32 %v1073, %v1074
        %v1076 = vrot.slane %v1075, 2
        %v1077 = vadd.f32 %v1075, %v1076
        %v1078 = vrot.slane %v1077, 1
        %v1079 = vadd.f32 %v1077, %v1078
        %1080 = vst [vmem:[%s13] sm:$0x1] %v1079
      $region72: #{flow_model_forward.1} parent=63 // pred_fallthru
        _
      // Predicated region
      $region73: #{flow_model_forward.1} parent=63 // pred_check
        %p1081 = pneg %p314
      $region74: #{flow_model_forward.1} parent=63 // pred_check_branch
        %1083 = sbr.rel (%p1081) target = $region76
      $region75: #{flow_model_forward.1} parent=63 // pred_region
        _
      $region76: #{flow_model_forward.1} parent=63 // pred_fallthru
        _
      // Predicated region
      $region77: #{flow_model_forward.1} parent=63 // pred_check
        %p1084 = pneg %p335
      $region78: #{flow_model_forward.1} parent=63 // pred_check_branch
        %1086 = sbr.rel (%p1084) target = $region80
      $region79: #{flow_model_forward.1} parent=63 // pred_region
        _
      $region80: #{flow_model_forward.1} parent=63 // pred_fallthru
        _
      // Predicated region
      $region81: #{flow_model_forward.1} parent=63 // pred_check
        %p1087 = pneg %p356
      $region82: #{flow_model_forward.1} parent=63 // pred_check_branch
        %1089 = sbr.rel (%p1087) target = $region84
      $region83: #{flow_model_forward.1} parent=63 // pred_region
        _
      $region84: #{flow_model_forward.1} parent=63 // pred_fallthru
        _
      // Predicated region
      $region85: #{flow_model_forward.1} parent=63 // pred_check
        %p1090 = pneg %p314
      $region86: #{flow_model_forward.1} parent=63 // pred_check_branch
        %1092 = sbr.rel (%p1090) target = $region88
      $region87: #{flow_model_forward.1} parent=63 // pred_region
        _
      $region88: #{flow_model_forward.1} parent=63 // pred_fallthru
        _
      // Predicated region
      $region89: #{flow_model_forward.1} parent=63 // pred_check
        %p1093 = pneg %p335
      $region90: #{flow_model_forward.1} parent=63 // pred_check_branch
        %1095 = sbr.rel (%p1093) target = $region92
      $region91: #{flow_model_forward.1} parent=63 // pred_region
        _
      $region92: #{flow_model_forward.1} parent=63 // pred_fallthru
        _
      // Predicated region
      $region93: #{flow_model_forward.1} parent=63 // pred_check
        %p1096 = pneg %p356
      $region94: #{flow_model_forward.1} parent=63 // pred_check_branch
        %1098 = sbr.rel (%p1096) target = $region96
      $region95: #{flow_model_forward.1} parent=63 // pred_region
        _
      $region96: #{flow_model_forward.1} parent=63 // pred_fallthru
        _
    $region64: #{flow_model_forward.1} parent=5 // pred_fallthru
      _
    %p1099 = scmp.le.s32.totalorder 2, %s20
    // Predicated region
    $region97: #{flow_model_forward.1} parent=5 // pred_check
      %p1100 = pneg %p1099
    $region98: #{flow_model_forward.1} parent=5 // pred_check_branch
      %1102 = sbr.rel (%p1100) target = $region100
    $region99: #{flow_model_forward.1} parent=5 // pred_region
      %s1103 = ssub.s32 %s20, 2
    $region100: #{flow_model_forward.1} parent=5 // pred_fallthru
      _
  $region6: #{flow_model_forward.1} parent=0 // loop_footer
    %s24 = sadd.s32 1, %s20
  $region7: #{flow_model_forward.1} parent=0 // loop_footer_branch
    %19 = sbr.rel target = $region3
  $region8: #{flow_model_forward.1} parent=0 // loop_exit
    _

</llo_original>
